<compile_context>
chip_gen: v7x
topology: tpu7x:2x2x1
jax: 0.10.0
libtpu: 0.0.40
codegen_flags: <defaults>
</compile_context>

<pallas_src>
import functools

import jax
import jax.numpy as jnp
from jax.experimental import pallas as pl
from jax.experimental.pallas import tpu as pltpu


# -----------------------------------------------------------------------------
# Pallas kernel: whole block forward for one batch tile.
# -----------------------------------------------------------------------------
def conv_block_kernel(x_ref,        # [Cin_pad, TB*HW] f32
                      cbn_ref,      # [TB, Cout, 4]    f32  (sc1, sh1, sc2, sh2)
                      basis_ref,    # [4, TB*HW]       f32  shift-validity basis
                      w1_ref,       # [Cout, 9*Cin_pad] bf16
                      w2_ref,       # [Cout, 9*Cout]    bf16
                      wres_ref,     # [Cout, Cin_pad]   bf16 (unused if identity)
                      pool_ref,     # [HW, HW//4]       bf16 avg-pool matrix
                      prelu_ref,    # SMEM [2] f32      (a_1, a_final)
                      out_ref,      # [TB, Cout, HW//4] f32
                      stack1_ref,   # VMEM [9*Cin_pad, TB*HW] bf16
                      stack2_ref,   # VMEM [9*Cout,    TB*HW] bf16
                      h1_ref,       # VMEM [Cout, TB*HW] f32
                      *, H, W, TB, cin_pad, cout, identity_res):
  f32 = jnp.float32
  bf16 = jnp.bfloat16
  HW = H * W
  N = TB * HW
  taps = [(dy, dx) for dy in (-1, 0, 1) for dx in (-1, 0, 1)]

  a1 = prelu_ref[0]
  a2 = prelu_ref[1]
  basis = basis_ref[...]          # rows: xx>=1, xx<=W-2, yy>=1, yy<=H-2 (0/1)
  cbn = cbn_ref[...]              # [TB, Cout, 4]

  def tap_mask(dy, dx):
    m = None
    if dx == -1:
      m = basis[0:1, :]
    elif dx == 1:
      m = basis[1:2, :]
    if dy == -1:
      m = basis[2:3, :] if m is None else m * basis[2:3, :]
    elif dy == 1:
      m = basis[3:4, :] if m is None else m * basis[3:4, :]
    return m

  def build_stack(feat, stack_ref, c):
    # stack rows [t*c:(t+1)*c] = mask_t * shift_{dy,dx}(feat), stored in bf16.
    for t, (dy, dx) in enumerate(taps):
      s = dy * W + dx
      if s == 0:
        shifted = feat                                    # centre tap
      else:
        shifted = pltpu.roll(feat, (-s) % N, axis=1) * tap_mask(dy, dx)
      stack_ref[t * c:(t + 1) * c, :] = shifted.astype(bf16)

  x = x_ref[...]                                          # [cin_pad, N] f32

  # ---- main_mapping_conv_1: one K = 9*cin_pad matmul over the im2col stack --
  build_stack(x, stack1_ref, cin_pad)
  h = jnp.dot(w1_ref[...], stack1_ref[...], preferred_element_type=f32)

  # ---- CBN 1 + PReLU (Dropout p=0): per-image scale/shift columns -----------
  for b in range(TB):
    hb = h[:, b * HW:(b + 1) * HW]
    hb = hb * cbn[b, :, 0:1] + cbn[b, :, 1:2]
    hb = jnp.where(hb >= 0, hb, a1 * hb)
    h1_ref[:, b * HW:(b + 1) * HW] = hb

  # ---- main_mapping_conv_2 ---------------------------------------------------
  build_stack(h1_ref[...], stack2_ref, cout)
  h2 = jnp.dot(w2_ref[...], stack2_ref[...], preferred_element_type=f32)

  # ---- residual mapping (identity when in_channels == out_channels) ---------
  if identity_res:
    res = x
  else:
    res = jnp.dot(wres_ref[...], x.astype(bf16), preferred_element_type=f32)

  # ---- CBN 2 + residual + final PReLU + AvgPool2d(2,2), per image slice -----
  pool = pool_ref[...]                                    # [HW, HW//4] bf16
  for b in range(TB):
    yb = h2[:, b * HW:(b + 1) * HW] * cbn[b, :, 2:3] + cbn[b, :, 3:4]
    yb = yb + res[:, b * HW:(b + 1) * HW]
    yb = jnp.where(yb >= 0, yb, a2 * yb)
    out_ref[b, :, :] = jnp.dot(yb.astype(bf16), pool, preferred_element_type=f32)


# -----------------------------------------------------------------------------
# Wrapper: parameter folding, layout plumbing, pallas_call.
# -----------------------------------------------------------------------------
def run_pallas(x, latent, p, *, tb=None):
  B, Cin, H, W = x.shape
  Cout = p['w1'].shape[0]
  HW = H * W
  HWq = HW // 4
  f32 = jnp.float32
  bf16 = jnp.bfloat16
  assert H % 2 == 0 and W % 2 == 0
  assert Cout % 16 == 0, "out_channels must be a multiple of 16 (bf16 sublane tile)"
  cin_pad = max(16, -(-Cin // 16) * 16)       # pad in-channels for the bf16 stack
  identity_res = (Cin == Cout)

  # batch tile: prefer >= 2 grid steps (v7x megacore / pipeline overlap)
  if tb is None:
    TB = B
    for cand in range(max(B // 2, 1), 0, -1):
      if B % cand == 0 and (cand * HW) % 128 == 0:
        TB = cand
        break
  else:
    TB = tb
  assert B % TB == 0 and ((TB * HW) % 128 == 0 or TB == B)
  N = TB * HW

  # ---- activations -----------------------------------------------------------
  x2 = jnp.transpose(x, (1, 0, 2, 3)).reshape(Cin, B * HW).astype(f32)
  x2 = jnp.pad(x2, ((0, cin_pad - Cin), (0, 0)))

  # ---- CBN latent Linear + eval-mode BN folding, done on host ---------------
  def fold(bn):
    gamma, beta, mean, var = bn
    sc = gamma / jnp.sqrt(var + 1e-5)
    return sc, beta - mean * sc
  bn1_sc, bn1_sh = fold(p['bn1'])
  bn2_sc, bn2_sh = fold(p['bn2'])
  sb1 = latent.astype(f32) @ p['wlin1'].T.astype(f32)        # [B, 2*Cout]
  sb2 = latent.astype(f32) @ p['wlin2'].T.astype(f32)
  s1, b1 = sb1[:, :Cout], sb1[:, Cout:]
  s2, b2 = sb2[:, :Cout], sb2[:, Cout:]
  cbn = jnp.stack([s1 * bn1_sc[None, :], s1 * bn1_sh[None, :] + b1,
                   s2 * bn2_sc[None, :], s2 * bn2_sh[None, :] + b2],
                  axis=-1).astype(f32)                        # [B, Cout, 4]

  # ---- conv weights flattened tap-major to [Cout, 9*C], bf16 -----------------
  def flatten_taps(w, c_pad):
    co, ci = w.shape[0], w.shape[1]
    wt = jnp.transpose(w, (0, 2, 3, 1))                      # [co, 3, 3, ci]
    wt = jnp.pad(wt, ((0, 0), (0, 0), (0, 0), (0, c_pad - ci)))
    return wt.reshape(co, 9 * c_pad).astype(bf16)
  w1_flat = flatten_taps(p['w1'], cin_pad)
  w2_flat = flatten_taps(p['w2'], Cout)
  if identity_res:
    wres = jnp.zeros((Cout, cin_pad), bf16)                  # unused in-kernel
  else:
    wres = jnp.pad(p['w_res'], ((0, 0), (0, cin_pad - Cin))).astype(bf16)

  # ---- small static tables ----------------------------------------------------
  xx = jnp.arange(HW, dtype=jnp.int32) % W
  yy = jnp.arange(HW, dtype=jnp.int32) // W
  basis1 = jnp.stack([(xx >= 1), (xx <= W - 2), (yy >= 1), (yy <= H - 2)],
                     axis=0).astype(f32)                     # [4, HW]
  basis = jnp.tile(basis1, (1, B))                           # [4, B*HW]

  col = (jnp.arange(H)[:, None] // 2) * (W // 2) + (jnp.arange(W)[None, :] // 2)
  p1 = ((col.reshape(HW, 1) == jnp.arange(HWq)[None, :]).astype(f32)
        * 0.25).astype(bf16)                                 # [HW, HW//4]

  prelu = jnp.stack([p['a1'], p['a2']]).astype(f32)          # SMEM [2]

  # ---- specs ------------------------------------------------------------------
  def const_spec(shape):
    zeros = (0,) * len(shape)
    return pl.BlockSpec(shape, lambda i: zeros)

  in_specs = [
      pl.BlockSpec((cin_pad, N), lambda i: (0, i)),          # x
      pl.BlockSpec((TB, Cout, 4), lambda i: (i, 0, 0)),      # CBN columns
      pl.BlockSpec((4, N), lambda i: (0, i)),                # mask basis
      const_spec((Cout, 9 * cin_pad)),                       # conv_1 weights
      const_spec((Cout, 9 * Cout)),                          # conv_2 weights
      const_spec((Cout, cin_pad)),                           # residual weights
      const_spec((HW, HWq)),                                 # avg-pool matrix
      pl.BlockSpec(memory_space=pltpu.MemorySpace.SMEM),     # PReLU scalars
  ]
  out_spec = pl.BlockSpec((TB, Cout, HWq), lambda i: (i, 0, 0))

  scratch_shapes = [
      pltpu.VMEM((9 * cin_pad, N), bf16),                    # conv_1 im2col stack
      pltpu.VMEM((9 * Cout, N), bf16),                       # conv_2 im2col stack
      pltpu.VMEM((Cout, N), f32),                            # activation between convs
  ]

  # advisory cost estimate (helps XLA overlap the custom call)
  flops = 2 * B * HW * Cout * (9 * cin_pad + 9 * Cout
                               + (0 if identity_res else cin_pad)) \
      + 2 * B * Cout * HWq * HW
  bytes_accessed = int(x2.size * 4 + cbn.size * 4 + basis.size * 4
                       + w1_flat.size * 2 + w2_flat.size * 2 + wres.size * 2
                       + p1.size * 2 + prelu.size * 4 + B * Cout * HWq * 4)
  cost = pl.CostEstimate(flops=int(flops), transcendentals=0,
                         bytes_accessed=bytes_accessed)

  # explicit VMEM budget from actual tile sizes (with headroom, never below 32 MiB)
  scratch_bytes = (9 * cin_pad + 9 * Cout) * N * 2 + Cout * N * 4
  io_bytes = 2 * (cin_pad * N * 4 + 4 * N * 4 + 2 * TB * Cout * 128 * 4
                  + Cout * (9 * cin_pad + 9 * Cout + cin_pad) * 2 + HW * 128 * 2)
  vmem_limit = min(max(2 * (scratch_bytes + io_bytes) + (4 << 20), 32 << 20),
                   100 << 20)

  kernel = functools.partial(conv_block_kernel, H=H, W=W, TB=TB,
                             cin_pad=cin_pad, cout=Cout,
                             identity_res=identity_res)

  out = pl.pallas_call(
      kernel,
      out_shape=jax.ShapeDtypeStruct((B, Cout, HWq), f32),
      grid=(B // TB,),
      in_specs=in_specs,
      out_specs=out_spec,
      scratch_shapes=scratch_shapes,
      compiler_params=pltpu.CompilerParams(
          dimension_semantics=("parallel",),
          vmem_limit_bytes=int(vmem_limit)),
      cost_estimate=cost,
  )(x2, cbn, basis, w1_flat, w2_flat, wres, p1, prelu)

  return out.reshape(B, Cout, H // 2, W // 2)


# -----------------------------------------------------------------------------
# Deterministic synthetic parameters (mirrors the module __init__ shapes)
# -----------------------------------------------------------------------------
def make_params(key, Cin, Cout, L):
  ks = iter(jax.random.split(key, 16))

  def nrm(shape, fan):
    return jax.random.normal(next(ks), shape, jnp.float32) / jnp.sqrt(fan)

  def bn_stats(c):  # (gamma, beta, running_mean, running_var)
    gamma = 1.0 + 0.1 * jax.random.normal(next(ks), (c,), jnp.float32)
    beta = 0.1 * jax.random.normal(next(ks), (c,), jnp.float32)
    mean = 0.1 * jax.random.normal(next(ks), (c,), jnp.float32)
    var = 1.0 + 0.1 * jnp.abs(jax.random.normal(next(ks), (c,), jnp.float32))
    return gamma, beta, mean, var

  p = {}
  p['w1'] = nrm((Cout, Cin, 3, 3), Cin * 9)            # main_mapping_conv_1
  p['bn1'] = bn_stats(Cout)                            # main_mapping_norm_1 BN
  p['wlin1'] = nrm((2 * Cout, L), L)                   # norm_1 linear_mapping
  p['a1'] = jnp.float32(0.25)                          # PReLU default
  p['w2'] = nrm((Cout, Cout, 3, 3), Cout * 9)          # main_mapping_conv_2
  p['bn2'] = bn_stats(Cout)                            # main_mapping_norm_2 BN
  p['wlin2'] = nrm((2 * Cout, L), L)                   # norm_2 linear_mapping
  p['w_res'] = (jnp.eye(Cout, dtype=jnp.float32) if Cin == Cout
                else nrm((Cout, Cin), Cin))            # residual_mapping (1x1)
  p['a2'] = jnp.float32(0.25)                          # final PReLU
  return p


# -----------------------------------------------------------------------------
# Pure-JAX reference (literal transcription of the PyTorch forward, eval BN)
# -----------------------------------------------------------------------------
def reference_forward(x, latent, p):
  eps = 1e-5

  def conv(inp, w):
    return jax.lax.conv_general_dilated(
        inp, w, window_strides=(1, 1), padding=((1, 1), (1, 1)),
        dimension_numbers=('NCHW', 'OIHW', 'NCHW'))

  def cbn(inp, bn, wlin):
    gamma, beta, mean, var = bn
    out = (inp - mean[None, :, None, None]) / jnp.sqrt(var[None, :, None, None] + eps)
    out = out * gamma[None, :, None, None] + beta[None, :, None, None]
    sb = latent @ wlin.T
    C = gamma.shape[0]
    scale = sb[:, :C][:, :, None, None]
    bias = sb[:, C:][:, :, None, None]
    return scale * out + bias

  h = conv(x, p['w1'])
  h = cbn(h, p['bn1'], p['wlin1'])
  h = jnp.where(h >= 0, h, p['a1'] * h)
  h = conv(h, p['w2'])
  h = cbn(h, p['bn2'], p['wlin2'])
  res = jnp.einsum('oc,bchw->bohw', p['w_res'], x)
  y = h + res
  y = jnp.where(y >= 0, y, p['a2'] * y)
  B, C, H, W = y.shape
  return y.reshape(B, C, H // 2, 2, W // 2, 2).mean(axis=(3, 5))


if __name__ == "__main__":
  B, Cin, Cout, H, W, L = 2, 4, 32, 16, 16, 256

  key = jax.random.PRNGKey(0)
  kx, kl, kp = jax.random.split(key, 3)
  x = jax.random.normal(kx, (B, Cin, H, W), jnp.float32)
  latent = jax.random.normal(kl, (B, L), jnp.float32)
  params = make_params(kp, Cin, Cout, L)

  y = jax.block_until_ready(run_pallas(x, latent, params))
  assert y.shape == (B, Cout, H // 2, W // 2)

  y_ref = reference_forward(x, latent, params)
  # bf16 MXU operands (per the perf review) introduce ~1e-2-level relative
  # error on the conv outputs; use a slightly relaxed tolerance.
  err = jnp.max(jnp.abs(y - y_ref))
  if not bool(jnp.all(jnp.abs(y - y_ref) <= 2e-2 + 2e-2 * jnp.abs(y_ref))):
    raise AssertionError(f"Pallas kernel mismatch vs reference, max abs err = {float(err)}")

  print("KERNEL_OK")
</pallas_src>

<mosaic_0001>
module attributes {stable_mosaic.version = 11 : i64} {
  func.func @conv_block_kernel(%arg0: i32, %arg1: memref<16x256xf32, #tpu.memory_space<vmem>>, %arg2: memref<1x32x4xf32, #tpu.memory_space<vmem>>, %arg3: memref<4x256xf32, #tpu.memory_space<vmem>>, %arg4: memref<32x144xbf16, #tpu.memory_space<vmem>>, %arg5: memref<32x288xbf16, #tpu.memory_space<vmem>>, %arg6: memref<32x16xbf16, #tpu.memory_space<vmem>>, %arg7: memref<256x64xbf16, #tpu.memory_space<vmem>>, %arg8: memref<2xf32, #tpu.memory_space<smem>>, %arg9: memref<1x32x64xf32, #tpu.memory_space<vmem>>, %arg10: memref<144x256xbf16, #tpu.memory_space<vmem>>, %arg11: memref<288x256xbf16, #tpu.memory_space<vmem>>, %arg12: memref<32x256xf32, #tpu.memory_space<vmem>>) attributes {dimension_semantics = [#tpu.dimension_semantics<parallel>], iteration_bounds = array<i64: 2>, scalar_prefetch = 0 : i64, scratch_operands = 3 : i64, tpu.core_type = #tpu.core_type<tc>, window_params = [{transform_indices = @transform_0, window_bounds = array<i64: 16, 256>}, {transform_indices = @transform_1, window_bounds = array<i64: 1, 32, 4>}, {transform_indices = @transform_2, window_bounds = array<i64: 4, 256>}, {pipeline_mode = #tpu.pipeline_mode<synchronous>, transform_indices = @transform_3, window_bounds = array<i64: 32, 144>}, {pipeline_mode = #tpu.pipeline_mode<synchronous>, transform_indices = @transform_4, window_bounds = array<i64: 32, 288>}, {pipeline_mode = #tpu.pipeline_mode<synchronous>, transform_indices = @transform_5, window_bounds = array<i64: 32, 16>}, {pipeline_mode = #tpu.pipeline_mode<synchronous>, transform_indices = @transform_6, window_bounds = array<i64: 256, 64>}, {transform_indices = @transform_7, window_bounds = array<i64: 2>}, {transform_indices = @transform_8, window_bounds = array<i64: 1, 32, 64>}]} {
    %c0 = arith.constant 0 : index
    %0 = memref.load %arg8[%c0] : memref<2xf32, #tpu.memory_space<smem>>
    %c1 = arith.constant 1 : index
    %1 = memref.load %arg8[%c1] : memref<2xf32, #tpu.memory_space<smem>>
    %c0_0 = arith.constant 0 : index
    %c0_1 = arith.constant 0 : index
    %2 = vector.load %arg3[%c0_0, %c0_1] : memref<4x256xf32, #tpu.memory_space<vmem>>, vector<4x256xf32>
    %c0_2 = arith.constant 0 : index
    %c0_3 = arith.constant 0 : index
    %c0_4 = arith.constant 0 : index
    %3 = vector.load %arg2[%c0_2, %c0_3, %c0_4] : memref<1x32x4xf32, #tpu.memory_space<vmem>>, vector<1x32x4xf32>
    %c0_5 = arith.constant 0 : index
    %c0_6 = arith.constant 0 : index
    %4 = vector.load %arg1[%c0_5, %c0_6] : memref<16x256xf32, #tpu.memory_space<vmem>>, vector<16x256xf32>
    %c17_i32 = arith.constant 17 : i32
    %5 = tpu.dynamic_rotate %4 by %c17_i32 dim 1 : vector<16x256xf32>, i32 -> vector<16x256xf32>
    %6 = vector.extract_strided_slice %2 {offsets = [0, 0], sizes = [1, 256], strides = [1, 1]} : vector<4x256xf32> to vector<1x256xf32>
    %7 = vector.extract_strided_slice %2 {offsets = [2, 0], sizes = [1, 256], strides = [1, 1]} : vector<4x256xf32> to vector<1x256xf32>
    %8 = arith.mulf %6, %7 : vector<1x256xf32>
    %9 = vector.broadcast %8 : vector<1x256xf32> to vector<16x256xf32>
    %10 = arith.mulf %5, %9 : vector<16x256xf32>
    %11 = arith.truncf %10 : vector<16x256xf32> to vector<16x256xbf16>
    %c0_7 = arith.constant 0 : index
    %c0_8 = arith.constant 0 : index
    %12 = vector.load %arg10[%c0_7, %c0_8] : memref<144x256xbf16, #tpu.memory_space<vmem>>, vector<16x256xbf16>
    tpu.vector_store %arg10[%c0_7, %c0_8], %11 {strides = array<i32>} : memref<144x256xbf16, #tpu.memory_space<vmem>>, vector<16x256xbf16>,
    %c16_i32 = arith.constant 16 : i32
    %13 = tpu.dynamic_rotate %4 by %c16_i32 dim 1 : vector<16x256xf32>, i32 -> vector<16x256xf32>
    %14 = vector.extract_strided_slice %2 {offsets = [2, 0], sizes = [1, 256], strides = [1, 1]} : vector<4x256xf32> to vector<1x256xf32>
    %15 = vector.broadcast %14 : vector<1x256xf32> to vector<16x256xf32>
    %16 = arith.mulf %13, %15 : vector<16x256xf32>
    %17 = arith.truncf %16 : vector<16x256xf32> to vector<16x256xbf16>
    %c16 = arith.constant 16 : index
    %c0_9 = arith.constant 0 : index
    %18 = vector.load %arg10[%c16, %c0_9] : memref<144x256xbf16, #tpu.memory_space<vmem>>, vector<16x256xbf16>
    tpu.vector_store %arg10[%c16, %c0_9], %17 {strides = array<i32>} : memref<144x256xbf16, #tpu.memory_space<vmem>>, vector<16x256xbf16>,
    %c15_i32 = arith.constant 15 : i32
    %19 = tpu.dynamic_rotate %4 by %c15_i32 dim 1 : vector<16x256xf32>, i32 -> vector<16x256xf32>
    %20 = vector.extract_strided_slice %2 {offsets = [1, 0], sizes = [1, 256], strides = [1, 1]} : vector<4x256xf32> to vector<1x256xf32>
    %21 = vector.extract_strided_slice %2 {offsets = [2, 0], sizes = [1, 256], strides = [1, 1]} : vector<4x256xf32> to vector<1x256xf32>
    %22 = arith.mulf %20, %21 : vector<1x256xf32>
    %23 = vector.broadcast %22 : vector<1x256xf32> to vector<16x256xf32>
    %24 = arith.mulf %19, %23 : vector<16x256xf32>
    %25 = arith.truncf %24 : vector<16x256xf32> to vector<16x256xbf16>
    %c32 = arith.constant 32 : index
    %c0_10 = arith.constant 0 : index
    %26 = vector.load %arg10[%c32, %c0_10] : memref<144x256xbf16, #tpu.memory_space<vmem>>, vector<16x256xbf16>
    tpu.vector_store %arg10[%c32, %c0_10], %25 {strides = array<i32>} : memref<144x256xbf16, #tpu.memory_space<vmem>>, vector<16x256xbf16>,
    %c1_i32 = arith.constant 1 : i32
    %27 = tpu.dynamic_rotate %4 by %c1_i32 dim 1 : vector<16x256xf32>, i32 -> vector<16x256xf32>
    %28 = vector.extract_strided_slice %2 {offsets = [0, 0], sizes = [1, 256], strides = [1, 1]} : vector<4x256xf32> to vector<1x256xf32>
    %29 = vector.broadcast %28 : vector<1x256xf32> to vector<16x256xf32>
    %30 = arith.mulf %27, %29 : vector<16x256xf32>
    %31 = arith.truncf %30 : vector<16x256xf32> to vector<16x256xbf16>
    %c48 = arith.constant 48 : index
    %c0_11 = arith.constant 0 : index
    %32 = vector.load %arg10[%c48, %c0_11] : memref<144x256xbf16, #tpu.memory_space<vmem>>, vector<16x256xbf16>
    tpu.vector_store %arg10[%c48, %c0_11], %31 {strides = array<i32>} : memref<144x256xbf16, #tpu.memory_space<vmem>>, vector<16x256xbf16>,
    %33 = arith.truncf %4 : vector<16x256xf32> to vector<16x256xbf16>
    %c64 = arith.constant 64 : index
    %c0_12 = arith.constant 0 : index
    %34 = vector.load %arg10[%c64, %c0_12] : memref<144x256xbf16, #tpu.memory_space<vmem>>, vector<16x256xbf16>
    tpu.vector_store %arg10[%c64, %c0_12], %33 {strides = array<i32>} : memref<144x256xbf16, #tpu.memory_space<vmem>>, vector<16x256xbf16>,
    %c255_i32 = arith.constant 255 : i32
    %35 = tpu.dynamic_rotate %4 by %c255_i32 dim 1 : vector<16x256xf32>, i32 -> vector<16x256xf32>
    %36 = vector.extract_strided_slice %2 {offsets = [1, 0], sizes = [1, 256], strides = [1, 1]} : vector<4x256xf32> to vector<1x256xf32>
    %37 = vector.broadcast %36 : vector<1x256xf32> to vector<16x256xf32>
    %38 = arith.mulf %35, %37 : vector<16x256xf32>
    %39 = arith.truncf %38 : vector<16x256xf32> to vector<16x256xbf16>
    %c80 = arith.constant 80 : index
    %c0_13 = arith.constant 0 : index
    %40 = vector.load %arg10[%c80, %c0_13] : memref<144x256xbf16, #tpu.memory_space<vmem>>, vector<16x256xbf16>
    tpu.vector_store %arg10[%c80, %c0_13], %39 {strides = array<i32>} : memref<144x256xbf16, #tpu.memory_space<vmem>>, vector<16x256xbf16>,
    %c241_i32 = arith.constant 241 : i32
    %41 = tpu.dynamic_rotate %4 by %c241_i32 dim 1 : vector<16x256xf32>, i32 -> vector<16x256xf32>
    %42 = vector.extract_strided_slice %2 {offsets = [0, 0], sizes = [1, 256], strides = [1, 1]} : vector<4x256xf32> to vector<1x256xf32>
    %43 = vector.extract_strided_slice %2 {offsets = [3, 0], sizes = [1, 256], strides = [1, 1]} : vector<4x256xf32> to vector<1x256xf32>
    %44 = arith.mulf %42, %43 : vector<1x256xf32>
    %45 = vector.broadcast %44 : vector<1x256xf32> to vector<16x256xf32>
    %46 = arith.mulf %41, %45 : vector<16x256xf32>
    %47 = arith.truncf %46 : vector<16x256xf32> to vector<16x256xbf16>
    %c96 = arith.constant 96 : index
    %c0_14 = arith.constant 0 : index
    %48 = vector.load %arg10[%c96, %c0_14] : memref<144x256xbf16, #tpu.memory_space<vmem>>, vector<16x256xbf16>
    tpu.vector_store %arg10[%c96, %c0_14], %47 {strides = array<i32>} : memref<144x256xbf16, #tpu.memory_space<vmem>>, vector<16x256xbf16>,
    %c240_i32 = arith.constant 240 : i32
    %49 = tpu.dynamic_rotate %4 by %c240_i32 dim 1 : vector<16x256xf32>, i32 -> vector<16x256xf32>
    %50 = vector.extract_strided_slice %2 {offsets = [3, 0], sizes = [1, 256], strides = [1, 1]} : vector<4x256xf32> to vector<1x256xf32>
    %51 = vector.broadcast %50 : vector<1x256xf32> to vector<16x256xf32>
    %52 = arith.mulf %49, %51 : vector<16x256xf32>
    %53 = arith.truncf %52 : vector<16x256xf32> to vector<16x256xbf16>
    %c112 = arith.constant 112 : index
    %c0_15 = arith.constant 0 : index
    %54 = vector.load %arg10[%c112, %c0_15] : memref<144x256xbf16, #tpu.memory_space<vmem>>, vector<16x256xbf16>
    tpu.vector_store %arg10[%c112, %c0_15], %53 {strides = array<i32>} : memref<144x256xbf16, #tpu.memory_space<vmem>>, vector<16x256xbf16>,
    %c239_i32 = arith.constant 239 : i32
    %55 = tpu.dynamic_rotate %4 by %c239_i32 dim 1 : vector<16x256xf32>, i32 -> vector<16x256xf32>
    %56 = vector.extract_strided_slice %2 {offsets = [1, 0], sizes = [1, 256], strides = [1, 1]} : vector<4x256xf32> to vector<1x256xf32>
    %57 = vector.extract_strided_slice %2 {offsets = [3, 0], sizes = [1, 256], strides = [1, 1]} : vector<4x256xf32> to vector<1x256xf32>
    %58 = arith.mulf %56, %57 : vector<1x256xf32>
    %59 = vector.broadcast %58 : vector<1x256xf32> to vector<16x256xf32>
    %60 = arith.mulf %55, %59 : vector<16x256xf32>
    %61 = arith.truncf %60 : vector<16x256xf32> to vector<16x256xbf16>
    %c128 = arith.constant 128 : index
    %c0_16 = arith.constant 0 : index
    %62 = vector.load %arg10[%c128, %c0_16] : memref<144x256xbf16, #tpu.memory_space<vmem>>, vector<16x256xbf16>
    tpu.vector_store %arg10[%c128, %c0_16], %61 {strides = array<i32>} : memref<144x256xbf16, #tpu.memory_space<vmem>>, vector<16x256xbf16>,
    %c0_17 = arith.constant 0 : index
    %c0_18 = arith.constant 0 : index
    %63 = vector.load %arg4[%c0_17, %c0_18] : memref<32x144xbf16, #tpu.memory_space<vmem>>, vector<32x144xbf16>
    %c0_19 = arith.constant 0 : index
    %c0_20 = arith.constant 0 : index
    %64 = vector.load %arg10[%c0_19, %c0_20] : memref<144x256xbf16, #tpu.memory_space<vmem>>, vector<144x256xbf16>
    %cst = arith.constant dense<0.000000e+00> : vector<32x256xf32>
    %65 = tpu.matmul %63, %64, %cst {dimension_numbers = #tpu.dot_dimension_numbers<[1], [0], [0], [1], [0, 0, 1, 1], [], []>} : vector<32x144xbf16>, vector<144x256xbf16>, vector<32x256xf32> -> vector<32x256xf32>
    %66 = vector.extract_strided_slice %3 {offsets = [0, 0, 0], sizes = [1, 32, 1], strides = [1, 1, 1]} : vector<1x32x4xf32> to vector<1x32x1xf32>
    %67 = vector.shape_cast %66 : vector<1x32x1xf32> to vector<32x1xf32>
    %68 = vector.broadcast %67 : vector<32x1xf32> to vector<32x256xf32>
    %69 = arith.mulf %65, %68 : vector<32x256xf32>
    %70 = vector.extract_strided_slice %3 {offsets = [0, 0, 1], sizes = [1, 32, 1], strides = [1, 1, 1]} : vector<1x32x4xf32> to vector<1x32x1xf32>
    %71 = vector.shape_cast %70 : vector<1x32x1xf32> to vector<32x1xf32>
    %72 = vector.broadcast %71 : vector<32x1xf32> to vector<32x256xf32>
    %73 = arith.addf %69, %72 : vector<32x256xf32>
    %cst_21 = arith.constant 0.000000e+00 : f32
    %74 = vector.broadcast %cst_21 : f32 to vector<32x256xf32>
    %75 = arith.cmpf oge, %73, %74 : vector<32x256xf32>
    %76 = vector.broadcast %0 : f32 to vector<32x256xf32>
    %77 = arith.mulf %76, %73 : vector<32x256xf32>
    %78 = arith.select %75, %73, %77 : vector<32x256xi1>, vector<32x256xf32>
    %c0_22 = arith.constant 0 : index
    %c0_23 = arith.constant 0 : index
    %79 = vector.load %arg12[%c0_22, %c0_23] : memref<32x256xf32, #tpu.memory_space<vmem>>, vector<32x256xf32>
    tpu.vector_store %arg12[%c0_22, %c0_23], %78 {strides = array<i32>} : memref<32x256xf32, #tpu.memory_space<vmem>>, vector<32x256xf32>,
    %c0_24 = arith.constant 0 : index
    %c0_25 = arith.constant 0 : index
    %80 = vector.load %arg12[%c0_24, %c0_25] : memref<32x256xf32, #tpu.memory_space<vmem>>, vector<32x256xf32>
    %c17_i32_26 = arith.constant 17 : i32
    %81 = tpu.dynamic_rotate %80 by %c17_i32_26 dim 1 : vector<32x256xf32>, i32 -> vector<32x256xf32>
    %82 = vector.extract_strided_slice %2 {offsets = [0, 0], sizes = [1, 256], strides = [1, 1]} : vector<4x256xf32> to vector<1x256xf32>
    %83 = vector.extract_strided_slice %2 {offsets = [2, 0], sizes = [1, 256], strides = [1, 1]} : vector<4x256xf32> to vector<1x256xf32>
    %84 = arith.mulf %82, %83 : vector<1x256xf32>
    %85 = vector.broadcast %84 : vector<1x256xf32> to vector<32x256xf32>
    %86 = arith.mulf %81, %85 : vector<32x256xf32>
    %87 = arith.truncf %86 : vector<32x256xf32> to vector<32x256xbf16>
    %c0_27 = arith.constant 0 : index
    %c0_28 = arith.constant 0 : index
    %88 = vector.load %arg11[%c0_27, %c0_28] : memref<288x256xbf16, #tpu.memory_space<vmem>>, vector<32x256xbf16>
    tpu.vector_store %arg11[%c0_27, %c0_28], %87 {strides = array<i32>} : memref<288x256xbf16, #tpu.memory_space<vmem>>, vector<32x256xbf16>,
    %c16_i32_29 = arith.constant 16 : i32
    %89 = tpu.dynamic_rotate %80 by %c16_i32_29 dim 1 : vector<32x256xf32>, i32 -> vector<32x256xf32>
    %90 = vector.extract_strided_slice %2 {offsets = [2, 0], sizes = [1, 256], strides = [1, 1]} : vector<4x256xf32> to vector<1x256xf32>
    %91 = vector.broadcast %90 : vector<1x256xf32> to vector<32x256xf32>
    %92 = arith.mulf %89, %91 : vector<32x256xf32>
    %93 = arith.truncf %92 : vector<32x256xf32> to vector<32x256xbf16>
    %c32_30 = arith.constant 32 : index
    %c0_31 = arith.constant 0 : index
    %94 = vector.load %arg11[%c32_30, %c0_31] : memref<288x256xbf16, #tpu.memory_space<vmem>>, vector<32x256xbf16>
    tpu.vector_store %arg11[%c32_30, %c0_31], %93 {strides = array<i32>} : memref<288x256xbf16, #tpu.memory_space<vmem>>, vector<32x256xbf16>,
    %c15_i32_32 = arith.constant 15 : i32
    %95 = tpu.dynamic_rotate %80 by %c15_i32_32 dim 1 : vector<32x256xf32>, i32 -> vector<32x256xf32>
    %96 = vector.extract_strided_slice %2 {offsets = [1, 0], sizes = [1, 256], strides = [1, 1]} : vector<4x256xf32> to vector<1x256xf32>
    %97 = vector.extract_strided_slice %2 {offsets = [2, 0], sizes = [1, 256], strides = [1, 1]} : vector<4x256xf32> to vector<1x256xf32>
    %98 = arith.mulf %96, %97 : vector<1x256xf32>
    %99 = vector.broadcast %98 : vector<1x256xf32> to vector<32x256xf32>
    %100 = arith.mulf %95, %99 : vector<32x256xf32>
    %101 = arith.truncf %100 : vector<32x256xf32> to vector<32x256xbf16>
    %c64_33 = arith.constant 64 : index
    %c0_34 = arith.constant 0 : index
    %102 = vector.load %arg11[%c64_33, %c0_34] : memref<288x256xbf16, #tpu.memory_space<vmem>>, vector<32x256xbf16>
    tpu.vector_store %arg11[%c64_33, %c0_34], %101 {strides = array<i32>} : memref<288x256xbf16, #tpu.memory_space<vmem>>, vector<32x256xbf16>,
    %c1_i32_35 = arith.constant 1 : i32
    %103 = tpu.dynamic_rotate %80 by %c1_i32_35 dim 1 : vector<32x256xf32>, i32 -> vector<32x256xf32>
    %104 = vector.extract_strided_slice %2 {offsets = [0, 0], sizes = [1, 256], strides = [1, 1]} : vector<4x256xf32> to vector<1x256xf32>
    %105 = vector.broadcast %104 : vector<1x256xf32> to vector<32x256xf32>
    %106 = arith.mulf %103, %105 : vector<32x256xf32>
    %107 = arith.truncf %106 : vector<32x256xf32> to vector<32x256xbf16>
    %c96_36 = arith.constant 96 : index
    %c0_37 = arith.constant 0 : index
    %108 = vector.load %arg11[%c96_36, %c0_37] : memref<288x256xbf16, #tpu.memory_space<vmem>>, vector<32x256xbf16>
    tpu.vector_store %arg11[%c96_36, %c0_37], %107 {strides = array<i32>} : memref<288x256xbf16, #tpu.memory_space<vmem>>, vector<32x256xbf16>,
    %109 = arith.truncf %80 : vector<32x256xf32> to vector<32x256xbf16>
    %c128_38 = arith.constant 128 : index
    %c0_39 = arith.constant 0 : index
    %110 = vector.load %arg11[%c128_38, %c0_39] : memref<288x256xbf16, #tpu.memory_space<vmem>>, vector<32x256xbf16>
    tpu.vector_store %arg11[%c128_38, %c0_39], %109 {strides = array<i32>} : memref<288x256xbf16, #tpu.memory_space<vmem>>, vector<32x256xbf16>,
    %c255_i32_40 = arith.constant 255 : i32
    %111 = tpu.dynamic_rotate %80 by %c255_i32_40 dim 1 : vector<32x256xf32>, i32 -> vector<32x256xf32>
    %112 = vector.extract_strided_slice %2 {offsets = [1, 0], sizes = [1, 256], strides = [1, 1]} : vector<4x256xf32> to vector<1x256xf32>
    %113 = vector.broadcast %112 : vector<1x256xf32> to vector<32x256xf32>
    %114 = arith.mulf %111, %113 : vector<32x256xf32>
    %115 = arith.truncf %114 : vector<32x256xf32> to vector<32x256xbf16>
    %c160 = arith.constant 160 : index
    %c0_41 = arith.constant 0 : index
    %116 = vector.load %arg11[%c160, %c0_41] : memref<288x256xbf16, #tpu.memory_space<vmem>>, vector<32x256xbf16>
    tpu.vector_store %arg11[%c160, %c0_41], %115 {strides = array<i32>} : memref<288x256xbf16, #tpu.memory_space<vmem>>, vector<32x256xbf16>,
    %c241_i32_42 = arith.constant 241 : i32
    %117 = tpu.dynamic_rotate %80 by %c241_i32_42 dim 1 : vector<32x256xf32>, i32 -> vector<32x256xf32>
    %118 = vector.extract_strided_slice %2 {offsets = [0, 0], sizes = [1, 256], strides = [1, 1]} : vector<4x256xf32> to vector<1x256xf32>
    %119 = vector.extract_strided_slice %2 {offsets = [3, 0], sizes = [1, 256], strides = [1, 1]} : vector<4x256xf32> to vector<1x256xf32>
    %120 = arith.mulf %118, %119 : vector<1x256xf32>
    %121 = vector.broadcast %120 : vector<1x256xf32> to vector<32x256xf32>
    %122 = arith.mulf %117, %121 : vector<32x256xf32>
    %123 = arith.truncf %122 : vector<32x256xf32> to vector<32x256xbf16>
    %c192 = arith.constant 192 : index
    %c0_43 = arith.constant 0 : index
    %124 = vector.load %arg11[%c192, %c0_43] : memref<288x256xbf16, #tpu.memory_space<vmem>>, vector<32x256xbf16>
    tpu.vector_store %arg11[%c192, %c0_43], %123 {strides = array<i32>} : memref<288x256xbf16, #tpu.memory_space<vmem>>, vector<32x256xbf16>,
    %c240_i32_44 = arith.constant 240 : i32
    %125 = tpu.dynamic_rotate %80 by %c240_i32_44 dim 1 : vector<32x256xf32>, i32 -> vector<32x256xf32>
    %126 = vector.extract_strided_slice %2 {offsets = [3, 0], sizes = [1, 256], strides = [1, 1]} : vector<4x256xf32> to vector<1x256xf32>
    %127 = vector.broadcast %126 : vector<1x256xf32> to vector<32x256xf32>
    %128 = arith.mulf %125, %127 : vector<32x256xf32>
    %129 = arith.truncf %128 : vector<32x256xf32> to vector<32x256xbf16>
    %c224 = arith.constant 224 : index
    %c0_45 = arith.constant 0 : index
    %130 = vector.load %arg11[%c224, %c0_45] : memref<288x256xbf16, #tpu.memory_space<vmem>>, vector<32x256xbf16>
    tpu.vector_store %arg11[%c224, %c0_45], %129 {strides = array<i32>} : memref<288x256xbf16, #tpu.memory_space<vmem>>, vector<32x256xbf16>,
    %c239_i32_46 = arith.constant 239 : i32
    %131 = tpu.dynamic_rotate %80 by %c239_i32_46 dim 1 : vector<32x256xf32>, i32 -> vector<32x256xf32>
    %132 = vector.extract_strided_slice %2 {offsets = [1, 0], sizes = [1, 256], strides = [1, 1]} : vector<4x256xf32> to vector<1x256xf32>
    %133 = vector.extract_strided_slice %2 {offsets = [3, 0], sizes = [1, 256], strides = [1, 1]} : vector<4x256xf32> to vector<1x256xf32>
    %134 = arith.mulf %132, %133 : vector<1x256xf32>
    %135 = vector.broadcast %134 : vector<1x256xf32> to vector<32x256xf32>
    %136 = arith.mulf %131, %135 : vector<32x256xf32>
    %137 = arith.truncf %136 : vector<32x256xf32> to vector<32x256xbf16>
    %c256 = arith.constant 256 : index
    %c0_47 = arith.constant 0 : index
    %138 = vector.load %arg11[%c256, %c0_47] : memref<288x256xbf16, #tpu.memory_space<vmem>>, vector<32x256xbf16>
    tpu.vector_store %arg11[%c256, %c0_47], %137 {strides = array<i32>} : memref<288x256xbf16, #tpu.memory_space<vmem>>, vector<32x256xbf16>,
    %c0_48 = arith.constant 0 : index
    %c0_49 = arith.constant 0 : index
    %139 = vector.load %arg5[%c0_48, %c0_49] : memref<32x288xbf16, #tpu.memory_space<vmem>>, vector<32x288xbf16>
    %c0_50 = arith.constant 0 : index
    %c0_51 = arith.constant 0 : index
    %140 = vector.load %arg11[%c0_50, %c0_51] : memref<288x256xbf16, #tpu.memory_space<vmem>>, vector<288x256xbf16>
    %cst_52 = arith.constant dense<0.000000e+00> : vector<32x256xf32>
    %141 = tpu.matmul %139, %140, %cst_52 {dimension_numbers = #tpu.dot_dimension_numbers<[1], [0], [0], [1], [0, 0, 1, 1], [], []>} : vector<32x288xbf16>, vector<288x256xbf16>, vector<32x256xf32> -> vector<32x256xf32>
    %c0_53 = arith.constant 0 : index
    %c0_54 = arith.constant 0 : index
    %142 = vector.load %arg6[%c0_53, %c0_54] : memref<32x16xbf16, #tpu.memory_space<vmem>>, vector<32x16xbf16>
    %143 = arith.truncf %4 : vector<16x256xf32> to vector<16x256xbf16>
    %cst_55 = arith.constant dense<0.000000e+00> : vector<32x256xf32>
    %144 = tpu.matmul %142, %143, %cst_55 {dimension_numbers = #tpu.dot_dimension_numbers<[1], [0], [0], [1], [0, 0, 1, 1], [], []>} : vector<32x16xbf16>, vector<16x256xbf16>, vector<32x256xf32> -> vector<32x256xf32>
    %c0_56 = arith.constant 0 : index
    %c0_57 = arith.constant 0 : index
    %145 = vector.load %arg7[%c0_56, %c0_57] : memref<256x64xbf16, #tpu.memory_space<vmem>>, vector<256x64xbf16>
    %146 = vector.extract_strided_slice %3 {offsets = [0, 0, 2], sizes = [1, 32, 1], strides = [1, 1, 1]} : vector<1x32x4xf32> to vector<1x32x1xf32>
    %147 = vector.shape_cast %146 : vector<1x32x1xf32> to vector<32x1xf32>
    %148 = vector.broadcast %147 : vector<32x1xf32> to vector<32x256xf32>
    %149 = arith.mulf %141, %148 : vector<32x256xf32>
    %150 = vector.extract_strided_slice %3 {offsets = [0, 0, 3], sizes = [1, 32, 1], strides = [1, 1, 1]} : vector<1x32x4xf32> to vector<1x32x1xf32>
    %151 = vector.shape_cast %150 : vector<1x32x1xf32> to vector<32x1xf32>
    %152 = vector.broadcast %151 : vector<32x1xf32> to vector<32x256xf32>
    %153 = arith.addf %149, %152 : vector<32x256xf32>
    %154 = arith.addf %153, %144 : vector<32x256xf32>
    %cst_58 = arith.constant 0.000000e+00 : f32
    %155 = vector.broadcast %cst_58 : f32 to vector<32x256xf32>
    %156 = arith.cmpf oge, %154, %155 : vector<32x256xf32>
    %157 = vector.broadcast %1 : f32 to vector<32x256xf32>
    %158 = arith.mulf %157, %154 : vector<32x256xf32>
    %159 = arith.select %156, %154, %158 : vector<32x256xi1>, vector<32x256xf32>
    %160 = arith.truncf %159 : vector<32x256xf32> to vector<32x256xbf16>
    %cst_59 = arith.constant dense<0.000000e+00> : vector<32x64xf32>
    %161 = tpu.matmul %160, %145, %cst_59 {dimension_numbers = #tpu.dot_dimension_numbers<[1], [0], [0], [1], [0, 0, 1, 1], [], []>} : vector<32x256xbf16>, vector<256x64xbf16>, vector<32x64xf32> -> vector<32x64xf32>
    %c0_60 = arith.constant 0 : index
    %c0_61 = arith.constant 0 : index
    %c0_62 = arith.constant 0 : index
    %162 = vector.load %arg9[%c0_60, %c0_61, %c0_62] : memref<1x32x64xf32, #tpu.memory_space<vmem>>, vector<1x32x64xf32>
    %163 = vector.shape_cast %162 : vector<1x32x64xf32> to vector<32x64xf32>
    %164 = vector.shape_cast %161 : vector<32x64xf32> to vector<1x32x64xf32>
    tpu.vector_store %arg9[%c0_60, %c0_61, %c0_62], %164 {strides = array<i32>} : memref<1x32x64xf32, #tpu.memory_space<vmem>>, vector<1x32x64xf32>,
    return
  }
  func.func @transform_0(%arg0: i32) -> (i32, i32) {
    %c0_i32 = arith.constant 0 : i32
    %c0_i32_0 = arith.constant 0 : i32
    return %c0_i32, %arg0 : i32, i32
  }
  func.func @transform_1(%arg0: i32) -> (i32, i32, i32) {
    %c0_i32 = arith.constant 0 : i32
    %c0_i32_0 = arith.constant 0 : i32
    %c0_i32_1 = arith.constant 0 : i32
    return %arg0, %c0_i32, %c0_i32_0 : i32, i32, i32
  }
  func.func @transform_2(%arg0: i32) -> (i32, i32) {
    %c0_i32 = arith.constant 0 : i32
    %c0_i32_0 = arith.constant 0 : i32
    return %c0_i32, %arg0 : i32, i32
  }
  func.func @transform_3(%arg0: i32) -> (i32, i32) {
    %c0_i32 = arith.constant 0 : i32
    %c0_i32_0 = arith.constant 0 : i32
    %c0_i32_1 = arith.constant 0 : i32
    return %c0_i32, %c0_i32_0 : i32, i32
  }
  func.func @transform_4(%arg0: i32) -> (i32, i32) {
    %c0_i32 = arith.constant 0 : i32
    %c0_i32_0 = arith.constant 0 : i32
    %c0_i32_1 = arith.constant 0 : i32
    return %c0_i32, %c0_i32_0 : i32, i32
  }
  func.func @transform_5(%arg0: i32) -> (i32, i32) {
    %c0_i32 = arith.constant 0 : i32
    %c0_i32_0 = arith.constant 0 : i32
    %c0_i32_1 = arith.constant 0 : i32
    return %c0_i32, %c0_i32_0 : i32, i32
  }
  func.func @transform_6(%arg0: i32) -> (i32, i32) {
    %c0_i32 = arith.constant 0 : i32
    %c0_i32_0 = arith.constant 0 : i32
    %c0_i32_1 = arith.constant 0 : i32
    return %c0_i32, %c0_i32_0 : i32, i32
  }
  func.func @transform_7(%arg0: i32) -> i32 {
    %c0_i32 = arith.constant 0 : i32
    %c0_i32_0 = arith.constant 0 : i32
    return %c0_i32 : i32
  }
  func.func @transform_8(%arg0: i32) -> (i32, i32, i32) {
    %c0_i32 = arith.constant 0 : i32
    %c0_i32_0 = arith.constant 0 : i32
    %c0_i32_1 = arith.constant 0 : i32
    return %arg0, %c0_i32, %c0_i32_0 : i32, i32, i32
  }
}

</mosaic_0001>

<llo_original>
// kernel: tpu_custom_call.1
$region0: #{tpu_custom_call.1}
  #allocation0 [shape = 'u32[]', space=smem, size = 0x4, offset = 0x4, fixed_abs, tag = 'smem constant byte address 0x4 - core index']
  #allocation1 [shape = 'u32[144,128]{1,0:T(1,128)}', space=vmem, size = 0x12000, scoped, tag = 'internal scratch']
  #allocation2 [shape = 'bf16[144,256]{1,0:T(16,128)(2,1)}', space=vmem, size = 0x12000, scoped, tag = 'scratch operand']
  #allocation3 [shape = 'bf16[288,256]{1,0:T(16,128)(2,1)}', space=vmem, size = 0x24000, scoped, tag = 'scratch operand']
  #allocation4 [shape = 'f32[32,256]{1,0:T(8,128)}', space=vmem, size = 0x8000, scoped, tag = 'scratch operand']
  %s0 = inlined_call_operand.vmem [shape: f32[16,512], index: 0, kind: input, shape index: {}]
  %s1 = inlined_call_operand.vmem [shape: f32[2,32,4], index: 1, kind: input, shape index: {}]
  %s2 = inlined_call_operand.vmem [shape: f32[4,512], index: 2, kind: input, shape index: {}]
  %s3 = inlined_call_operand.vmem [shape: bf16[32,144], index: 3, kind: input, shape index: {}]
  %s4 = inlined_call_operand.vmem [shape: bf16[32,288], index: 4, kind: input, shape index: {}]
  %s5 = inlined_call_operand.vmem [shape: bf16[32,16], index: 5, kind: input, shape index: {}]
  %s6 = inlined_call_operand.vmem [shape: bf16[256,64], index: 6, kind: input, shape index: {}]
  %s7 = inlined_call_operand.vmem [shape: f32[2], index: 7, kind: input, shape index: {}]
  %s8 = inlined_call_operand.hbm [shape: f32[2,32,64], index: 8, kind: output, shape index: {}]
  %s9 = sld [smem:[#allocation0]]
  $region92: #{tpu_custom_call.1} parent=0
    _
  %s11 = ssub.s32 1, %s9
  %s12 = scalar_select 0, %s11, %s9
  $region1: #{tpu_custom_call.1} parent=0
    #allocation5 [shape = 'u8[32768]{0}', space=vmem, size = 0x8000, scoped, tag = 'input window, operand 0']
    #allocation6 [shape = 'u8[512]{0}', space=smem, size = 0x200, scoped, tag = 'input window, operand 7, single buffered']
    #allocation7 [shape = 's32[2]{0}', space=sflag, size = 0x8, scoped, tag = 'scoped memory for tpu_custom_call.1']
    #allocation8 [shape = 's32[2]{0}', space=sflag, size = 0x8, scoped, tag = 'scoped memory for tpu_custom_call.1']
    #allocation9 [shape = 'u8[32768]{0}', space=vmem, size = 0x8000, scoped, tag = 'output window, operand 0']
    %13 = vsyncpa [#allocation8], 0
    %14 = vsyncpa [#allocation7], 0
    %s15 = scalar_lea.sflag [#allocation7], 1
    %16 = vsyncpa %s15, 0
    loop: start=0, step=1, limit=4
    $region2: #{tpu_custom_call.1} parent=1 // loop_pre_header
      _
    $region3: #{tpu_custom_call.1} parent=1 // loop_header
      %s18 = sphi 0, %s22
      %p19 = scmp.ge.s32.totalorder %s18, 4
      %s28 = sphi 0, %s30
      %s31 = sphi 0, %s28
      %s32 = sphi 0, %s31
      %s48 = sphi 0, %s32
      %s54 = sphi 0, %s56
      %s57 = sphi 0, %s54
      %s58 = sphi 0, %s57
      %s74 = sphi 0, %s58
      %s80 = sphi 0, %s82
      %s83 = sphi 0, %s80
      %s84 = sphi 0, %s83
      %s100 = sphi 0, %s84
      %s104 = sphi 0, %s104
      %s106 = sphi 0, %s104
      %s107 = sphi 0, %s106
      %s121 = sphi 0, %s107
      %s125 = sphi 0, %s125
      %s127 = sphi 0, %s125
      %s128 = sphi 0, %s127
      %s142 = sphi 0, %s128
      %s146 = sphi 0, %s146
      %s148 = sphi 0, %s146
      %s149 = sphi 0, %s148
      %s163 = sphi 0, %s149
      %s167 = sphi 0, %s167
      %s169 = sphi 0, %s167
      %s170 = sphi 0, %s169
      %s184 = sphi 0, %s170
      %s188 = sphi 0, %s188
      %s190 = sphi 0, %s188
      %s191 = sphi 0, %s190
      %s205 = sphi 0, %s191
      %s211 = sphi 0, %s213
      %s214 = sphi 0, %s211
      %s215 = sphi 0, %s214
      %s231 = sphi 0, %s215
    $region4: #{tpu_custom_call.1} parent=1 // loop_header_branch
      %21 = sbr.rel (%p19) target = $region8
    $region5: #{tpu_custom_call.1} parent=1 // loop_body
      %s23 = ssub.s32 %s18, 1
      %s24 = ssub.s32 %s18, 2
      %s25 = sadd.s32 %s18, 1
      %s26 = ssub.s32 %s18, %s25
      %p27 = scmp.eq.s32.totalorder %s26, 0
      %s29 = sadd.s32 %s28, 1
      %s30 = scalar_select %p27, %s28, %s29
      %p33 = pneg %p27
      %p34 = scmp.eq.s32.totalorder %s18, 1
      %p35 = por %p33, %p34
      %p36 = scmp.ne.s32.totalorder %s28, %s31
      %p37 = scmp.eq.s32.totalorder %s18, 0
      %p38 = por %p36, %p37
      %p39 = scmp.ne.s32.totalorder %s28, %s31
      %p40 = scmp.eq.s32.totalorder %s23, 1
      %p41 = por %p39, %p40
      %p42 = scmp.ne.s32.totalorder %s31, %s32
      %p43 = scmp.eq.s32.totalorder %s23, 0
      %p44 = por %p42, %p43
      %p45 = scmp.ne.s32.totalorder %s31, %s32
      %p46 = scmp.eq.s32.totalorder %s24, 1
      %p47 = por %p45, %p46
      %p49 = scmp.ne.s32.totalorder %s32, %s48
      %p50 = scmp.eq.s32.totalorder %s24, 0
      %p51 = por %p49, %p50
      %s52 = ssub.s32 %s18, %s25
      %p53 = scmp.eq.s32.totalorder %s52, 0
      %s55 = sadd.s32 %s54, 1
      %s56 = scalar_select %p53, %s54, %s55
      %p59 = pneg %p53
      %p60 = scmp.eq.s32.totalorder %s18, 1
      %p61 = por %p59, %p60
      %p62 = scmp.ne.s32.totalorder %s54, %s57
      %p63 = scmp.eq.s32.totalorder %s18, 0
      %p64 = por %p62, %p63
      %p65 = scmp.ne.s32.totalorder %s54, %s57
      %p66 = scmp.eq.s32.totalorder %s23, 1
      %p67 = por %p65, %p66
      %p68 = scmp.ne.s32.totalorder %s57, %s58
      %p69 = scmp.eq.s32.totalorder %s23, 0
      %p70 = por %p68, %p69
      %p71 = scmp.ne.s32.totalorder %s57, %s58
      %p72 = scmp.eq.s32.totalorder %s24, 1
      %p73 = por %p71, %p72
      %p75 = scmp.ne.s32.totalorder %s58, %s74
      %p76 = scmp.eq.s32.totalorder %s24, 0
      %p77 = por %p75, %p76
      %s78 = ssub.s32 %s18, %s25
      %p79 = scmp.eq.s32.totalorder %s78, 0
      %s81 = sadd.s32 %s80, 1
      %s82 = scalar_select %p79, %s80, %s81
      %p85 = pneg %p79
      %p86 = scmp.eq.s32.totalorder %s18, 1
      %p87 = por %p85, %p86
      %p88 = scmp.ne.s32.totalorder %s80, %s83
      %p89 = scmp.eq.s32.totalorder %s18, 0
      %p90 = por %p88, %p89
      %p91 = scmp.ne.s32.totalorder %s80, %s83
      %p92 = scmp.eq.s32.totalorder %s23, 1
      %p93 = por %p91, %p92
      %p94 = scmp.ne.s32.totalorder %s83, %s84
      %p95 = scmp.eq.s32.totalorder %s23, 0
      %p96 = por %p94, %p95
      %p97 = scmp.ne.s32.totalorder %s83, %s84
      %p98 = scmp.eq.s32.totalorder %s24, 1
      %p99 = por %p97, %p98
      %p101 = scmp.ne.s32.totalorder %s84, %s100
      %p102 = scmp.eq.s32.totalorder %s24, 0
      %p103 = por %p101, %p102
      %s105 = sadd.s32 %s104, 1
      %p108 = scmp.eq.s32.totalorder %s18, 1
      %p109 = scmp.ne.s32.totalorder %s104, %s106
      %p110 = scmp.eq.s32.totalorder %s18, 0
      %p111 = por %p109, %p110
      %p112 = scmp.ne.s32.totalorder %s104, %s106
      %p113 = scmp.eq.s32.totalorder %s23, 1
      %p114 = por %p112, %p113
      %p115 = scmp.ne.s32.totalorder %s106, %s107
      %p116 = scmp.eq.s32.totalorder %s23, 0
      %p117 = por %p115, %p116
      %p118 = scmp.ne.s32.totalorder %s106, %s107
      %p119 = scmp.eq.s32.totalorder %s24, 1
      %p120 = por %p118, %p119
      %p122 = scmp.ne.s32.totalorder %s107, %s121
      %p123 = scmp.eq.s32.totalorder %s24, 0
      %p124 = por %p122, %p123
      %s126 = sadd.s32 %s125, 1
      %p129 = scmp.eq.s32.totalorder %s18, 1
      %p130 = scmp.ne.s32.totalorder %s125, %s127
      %p131 = scmp.eq.s32.totalorder %s18, 0
      %p132 = por %p130, %p131
      %p133 = scmp.ne.s32.totalorder %s125, %s127
      %p134 = scmp.eq.s32.totalorder %s23, 1
      %p135 = por %p133, %p134
      %p136 = scmp.ne.s32.totalorder %s127, %s128
      %p137 = scmp.eq.s32.totalorder %s23, 0
      %p138 = por %p136, %p137
      %p139 = scmp.ne.s32.totalorder %s127, %s128
      %p140 = scmp.eq.s32.totalorder %s24, 1
      %p141 = por %p139, %p140
      %p143 = scmp.ne.s32.totalorder %s128, %s142
      %p144 = scmp.eq.s32.totalorder %s24, 0
      %p145 = por %p143, %p144
      %s147 = sadd.s32 %s146, 1
      %p150 = scmp.eq.s32.totalorder %s18, 1
      %p151 = scmp.ne.s32.totalorder %s146, %s148
      %p152 = scmp.eq.s32.totalorder %s18, 0
      %p153 = por %p151, %p152
      %p154 = scmp.ne.s32.totalorder %s146, %s148
      %p155 = scmp.eq.s32.totalorder %s23, 1
      %p156 = por %p154, %p155
      %p157 = scmp.ne.s32.totalorder %s148, %s149
      %p158 = scmp.eq.s32.totalorder %s23, 0
      %p159 = por %p157, %p158
      %p160 = scmp.ne.s32.totalorder %s148, %s149
      %p161 = scmp.eq.s32.totalorder %s24, 1
      %p162 = por %p160, %p161
      %p164 = scmp.ne.s32.totalorder %s149, %s163
      %p165 = scmp.eq.s32.totalorder %s24, 0
      %p166 = por %p164, %p165
      %s168 = sadd.s32 %s167, 1
      %p171 = scmp.eq.s32.totalorder %s18, 1
      %p172 = scmp.ne.s32.totalorder %s167, %s169
      %p173 = scmp.eq.s32.totalorder %s18, 0
      %p174 = por %p172, %p173
      %p175 = scmp.ne.s32.totalorder %s167, %s169
      %p176 = scmp.eq.s32.totalorder %s23, 1
      %p177 = por %p175, %p176
      %p178 = scmp.ne.s32.totalorder %s169, %s170
      %p179 = scmp.eq.s32.totalorder %s23, 0
      %p180 = por %p178, %p179
      %p181 = scmp.ne.s32.totalorder %s169, %s170
      %p182 = scmp.eq.s32.totalorder %s24, 1
      %p183 = por %p181, %p182
      %p185 = scmp.ne.s32.totalorder %s170, %s184
      %p186 = scmp.eq.s32.totalorder %s24, 0
      %p187 = por %p185, %p186
      %s189 = sadd.s32 %s188, 1
      %p192 = scmp.eq.s32.totalorder %s18, 1
      %p193 = scmp.ne.s32.totalorder %s188, %s190
      %p194 = scmp.eq.s32.totalorder %s18, 0
      %p195 = por %p193, %p194
      %p196 = scmp.ne.s32.totalorder %s188, %s190
      %p197 = scmp.eq.s32.totalorder %s23, 1
      %p198 = por %p196, %p197
      %p199 = scmp.ne.s32.totalorder %s190, %s191
      %p200 = scmp.eq.s32.totalorder %s23, 0
      %p201 = por %p199, %p200
      %p202 = scmp.ne.s32.totalorder %s190, %s191
      %p203 = scmp.eq.s32.totalorder %s24, 1
      %p204 = por %p202, %p203
      %p206 = scmp.ne.s32.totalorder %s191, %s205
      %p207 = scmp.eq.s32.totalorder %s24, 0
      %p208 = por %p206, %p207
      %s209 = ssub.s32 %s18, %s25
      %p210 = scmp.eq.s32.totalorder %s209, 0
      %s212 = sadd.s32 %s211, 1
      %s213 = scalar_select %p210, %s211, %s212
      %p216 = pneg %p210
      %p217 = scmp.eq.s32.totalorder %s18, 1
      %p218 = por %p216, %p217
      %p219 = scmp.ne.s32.totalorder %s211, %s214
      %p220 = scmp.eq.s32.totalorder %s18, 0
      %p221 = por %p219, %p220
      %p222 = scmp.ne.s32.totalorder %s211, %s214
      %p223 = scmp.eq.s32.totalorder %s23, 1
      %p224 = por %p222, %p223
      %p225 = scmp.ne.s32.totalorder %s214, %s215
      %p226 = scmp.eq.s32.totalorder %s23, 0
      %p227 = por %p225, %p226
      %p228 = scmp.ne.s32.totalorder %s214, %s215
      %p229 = scmp.eq.s32.totalorder %s24, 1
      %p230 = por %p228, %p229
      %p232 = scmp.ne.s32.totalorder %s215, %s231
      %p233 = scmp.eq.s32.totalorder %s24, 0
      %p234 = por %p232, %p233
      %p235 = scmp.le.s32.totalorder 1, %s18
      %p236 = scmp.lt.s32.totalorder %s18, 3
      %p237 = pnand %p235, %p236
      %p238 = pneg %p237
      // Predicated region
      $region9: #{tpu_custom_call.1} parent=5 // pred_check
        _
      $region10: #{tpu_custom_call.1} parent=5 // pred_check_branch
        %240 = sbr.rel (%p237) target = $region12
      $region11: #{tpu_custom_call.1} parent=5 // pred_region
        %s241 = ssub.s32 %s18, 1
        // Predicated region
        $region13: #{tpu_custom_call.1} parent=11 // pred_check
          %p242 = pneg %p117
        $region14: #{tpu_custom_call.1} parent=11 // pred_check_branch
          %244 = sbr.rel (%p242) target = $region16
        $region15: #{tpu_custom_call.1} parent=11 // pred_region
          _
        $region16: #{tpu_custom_call.1} parent=11 // pred_fallthru
          _
        // Predicated region
        $region17: #{tpu_custom_call.1} parent=11 // pred_check
          %p245 = pneg %p138
        $region18: #{tpu_custom_call.1} parent=11 // pred_check_branch
          %247 = sbr.rel (%p245) target = $region20
        $region19: #{tpu_custom_call.1} parent=11 // pred_region
          _
        $region20: #{tpu_custom_call.1} parent=11 // pred_fallthru
          _
        // Predicated region
        $region21: #{tpu_custom_call.1} parent=11 // pred_check
          %p248 = pneg %p159
        $region22: #{tpu_custom_call.1} parent=11 // pred_check_branch
          %250 = sbr.rel (%p248) target = $region24
        $region23: #{tpu_custom_call.1} parent=11 // pred_region
          _
        $region24: #{tpu_custom_call.1} parent=11 // pred_fallthru
          _
        // Predicated region
        $region25: #{tpu_custom_call.1} parent=11 // pred_check
          %p251 = pneg %p180
        $region26: #{tpu_custom_call.1} parent=11 // pred_check_branch
          %253 = sbr.rel (%p251) target = $region28
        $region27: #{tpu_custom_call.1} parent=11 // pred_region
          _
        $region28: #{tpu_custom_call.1} parent=11 // pred_fallthru
          _
        // Predicated region
        $region29: #{tpu_custom_call.1} parent=11 // pred_check
          %p254 = pneg %p201
        $region30: #{tpu_custom_call.1} parent=11 // pred_check_branch
          %256 = sbr.rel (%p254) target = $region32
        $region31: #{tpu_custom_call.1} parent=11 // pred_region
          %s258 = ssub.s32 16, 16
          %259 = vsyncadd [#allocation8], %s258
          %s261 = sshll.u32 %s7, 4
          %s262 = int_to_ptr.vmem [resolvable:$true] %s261
          %264 = dma.vmem_to_smem %s262, 16, [#allocation6], [#allocation8]
        $region32: #{tpu_custom_call.1} parent=11 // pred_fallthru
          _
      $region12: #{tpu_custom_call.1} parent=5 // pred_fallthru
        _
      %p265 = scmp.lt.s32.totalorder %s18, 2
      // Predicated region
      $region33: #{tpu_custom_call.1} parent=5 // pred_check
        %p266 = pneg %p265
      $region34: #{tpu_custom_call.1} parent=5 // pred_check_branch
        %268 = sbr.rel (%p266) target = $region36
      $region35: #{tpu_custom_call.1} parent=5 // pred_region
        // Predicated region
        $region37: #{tpu_custom_call.1} parent=35 // pred_check
          %p269 = pneg %p38
        $region38: #{tpu_custom_call.1} parent=35 // pred_check_branch
          %271 = sbr.rel (%p269) target = $region40
        $region39: #{tpu_custom_call.1} parent=35 // pred_region
          %s272 = sand.u32 %s28, 1
          %s273 = sand.u32 %s28, 1
          %s274 = smul.addr %s273, 32
          %s275 = scalar_lea.vmem [#allocation5], %s274
          %s276 = smul.u32 2, %s18
          %s277 = smul.addr %s276, 8
          %s278 = scalar_lea.vmem %s0, %s277
          // Predicated region
          $region41: #{tpu_custom_call.1} parent=39 // pred_check
            _
          $region42: #{tpu_custom_call.1} parent=39 // pred_check_branch
            %280 = sbr.rel (0) target = $region44
          $region43: #{tpu_custom_call.1} parent=39 // pred_region
            // Predicated region
            $region45: #{tpu_custom_call.1} parent=43 // pred_check
              _
            $region46: #{tpu_custom_call.1} parent=43 // pred_check_branch
              %282 = sbr.rel (0) target = $region48
            $region47: #{tpu_custom_call.1} parent=43 // pred_region
              loop: start=0, step=1, limit=1
              $region49: #{tpu_custom_call.1} parent=47 // loop_pre_header
                _
              $region50: #{tpu_custom_call.1} parent=47 // loop_header
                %s284 = sphi 0, %s288
                %p285 = scmp.ge.s32.totalorder %s284, 1
                %s289 = sphi %s278, %s278
                %s290 = sphi %s275, %s275
              $region51: #{tpu_custom_call.1} parent=47 // loop_header_branch
                %287 = sbr.rel (%p285) target = $region55
              $region52: #{tpu_custom_call.1} parent=47 // loop_body
                %v291 = vld [vmem:[%s289] sm:$0xff]
                %292 = vst [vmem:[%s290] sm:$0xff] %v291
                %v293 = vld [vmem:[%s289 + $0x8] sm:$0xff]
                %294 = vst [vmem:[%s290 + $0x8] sm:$0xff] %v293
                %v295 = vld [vmem:[%s289 + $0x20] sm:$0xff]
                %296 = vst [vmem:[%s290 + $0x10] sm:$0xff] %v295
                %v297 = vld [vmem:[%s289 + $0x28] sm:$0xff]
                %298 = vst [vmem:[%s290 + $0x18] sm:$0xff] %v297
              $region53: #{tpu_custom_call.1} parent=47 // loop_footer
                %s288 = sadd.s32 1, %s284
              $region54: #{tpu_custom_call.1} parent=47 // loop_footer_branch
                %283 = sbr.rel target = $region50
              $region55: #{tpu_custom_call.1} parent=47 // loop_exit
                _
            $region48: #{tpu_custom_call.1} parent=43 // pred_fallthru
              _
            // Predicated region
            $region56: #{tpu_custom_call.1} parent=43 // pred_check
              _
            $region57: #{tpu_custom_call.1} parent=43 // pred_check_branch
              %300 = sbr.rel target = $region59
            $region58: #{tpu_custom_call.1} parent=43 // pred_region
              _
            $region59: #{tpu_custom_call.1} parent=43 // pred_fallthru
              _
          $region44: #{tpu_custom_call.1} parent=39 // pred_fallthru
            _
          %301 = vnop
        $region40: #{tpu_custom_call.1} parent=35 // pred_fallthru
          _
        // Predicated region
        $region60: #{tpu_custom_call.1} parent=35 // pred_check
          %p302 = pneg %p64
        $region61: #{tpu_custom_call.1} parent=35 // pred_check_branch
          %304 = sbr.rel (%p302) target = $region63
        $region62: #{tpu_custom_call.1} parent=35 // pred_region
          %p305 = scmp.lt.s32.totalorder %s18, 1
          %s306 = scalar_select %p305, %s18, 1
          %s307 = smul.addr %s306, 4
          %s308 = smul.addr %s307, 8
          %s309 = scalar_lea.vmem %s1, %s308
        $region63: #{tpu_custom_call.1} parent=35 // pred_fallthru
          _
        // Predicated region
        $region64: #{tpu_custom_call.1} parent=35 // pred_check
          %p310 = pneg %p90
        $region65: #{tpu_custom_call.1} parent=35 // pred_check_branch
          %312 = sbr.rel (%p310) target = $region67
        $region66: #{tpu_custom_call.1} parent=35 // pred_region
          %s313 = smul.u32 2, %s18
          %p314 = scmp.lt.s32.totalorder %s313, 3
          %s315 = scalar_select %p314, %s313, 3
          %s316 = smul.addr %s315, 4
          %s317 = scalar_lea.vmem %s2, %s316
          %s318 = smul.u32 2, %s18
        $region67: #{tpu_custom_call.1} parent=35 // pred_fallthru
          _
      $region36: #{tpu_custom_call.1} parent=5 // pred_fallthru
        _
      %p319 = scmp.le.s32.totalorder 1, %s18
      %p320 = scmp.lt.s32.totalorder %s18, 3
      %p321 = pnand %p319, %p320
      %p322 = pneg %p321
      // Predicated region
      $region68: #{tpu_custom_call.1} parent=5 // pred_check
        _
      $region69: #{tpu_custom_call.1} parent=5 // pred_check_branch
        %324 = sbr.rel (%p321) target = $region71
      $region70: #{tpu_custom_call.1} parent=5 // pred_region
        %s325 = ssub.s32 %s18, 1
        %s326 = sand.u32 %s31, 1
        %s327 = sand.u32 %s31, 1
        %s328 = smul.addr %s327, 32
        %s329 = scalar_lea.vmem [#allocation5], %s328
        // Predicated region
        $region72: #{tpu_custom_call.1} parent=70 // pred_check
          %p330 = pneg %p44
        $region73: #{tpu_custom_call.1} parent=70 // pred_check_branch
          %332 = sbr.rel (%p330) target = $region75
        $region74: #{tpu_custom_call.1} parent=70 // pred_region
          _
        $region75: #{tpu_custom_call.1} parent=70 // pred_fallthru
          _
        // Predicated region
        $region76: #{tpu_custom_call.1} parent=70 // pred_check
          %p333 = pneg %p201
        $region77: #{tpu_custom_call.1} parent=70 // pred_check_branch
          %335 = sbr.rel (%p333) target = $region79
        $region78: #{tpu_custom_call.1} parent=70 // pred_region
          %336 = dma.done [#allocation8], 16
        $region79: #{tpu_custom_call.1} parent=70 // pred_fallthru
          _
        %337 = sfence
        %s338 = sand.u32 %s31, 1
        %s339 = sand.u32 %s31, 1
        %s340 = smul.addr %s339, 32
        %s341 = scalar_lea.vmem [#allocation5], %s340
        %p342 = pneg %p44
        %p343 = pneg %p41
        %p344 = scmp.lt.s32.totalorder %s23, 1
        %s345 = scalar_select %p344, %s23, 1
        %s346 = smul.addr %s345, 4
        %s347 = smul.addr %s346, 8
        %s348 = scalar_lea.vmem %s1, %s347
        %p349 = pneg %p70
        %p350 = pneg %p67
        %s351 = smul.u32 2, %s23
        %p352 = scmp.lt.s32.totalorder %s351, 3
        %s353 = scalar_select %p352, %s351, 3
        %s354 = smul.addr %s353, 4
        %s355 = scalar_lea.vmem %s2, %s354
        %p356 = pneg %p96
        %p357 = pneg %p93
        %p358 = pneg %p117
        %p359 = pneg %p114
        %p360 = pneg %p138
        %p361 = pneg %p135
        %p362 = pneg %p159
        %p363 = pneg %p156
        %p364 = pneg %p180
        %p365 = pneg %p177
        %p366 = pneg %p201
        %p367 = pneg %p198
        %p368 = pneg %p227
        %p369 = pneg %p224
        %s370 = sand.u32 %s214, 1
        %s371 = scalar_lea.sflag [#allocation7], %s370
        %s372 = sand.u32 %s214, 1
        %s373 = smul.addr %s372, 32
        %s374 = scalar_lea.vmem [#allocation9], %s373
        %s375 = smul.u32 2, %s23
        %p376 = scmp.lt.s32.totalorder %s23, 1
        %s377 = scalar_select %p376, %s23, 1
        %s378 = smul.addr %s377, 4
        %s379 = smul.addr %s378, 8
        %s380 = scalar_lea.vmem %s1, %s379
        %s381 = smul.u32 2, %s23
        %p382 = scmp.lt.s32.totalorder %s381, 3
        %s383 = scalar_select %p382, %s381, 3
        %s384 = smul.addr %s383, 4
        %s385 = scalar_lea.vmem %s2, %s384
        %s386 = smul.u32 2, %s23
        %s388 = sld [smem:[#allocation6]]
        %s389 = sld [smem:[#allocation6 + $0x1]]
        %v390 = vld [vmem:[%s385] sm:$0xff]
        %v391 = vld [vmem:[%s380] sm:$0xff]
        %v392 = vld [vmem:[%s380 + $0x8] sm:$0xff]
        %v393 = vld [vmem:[%s380 + $0x10] sm:$0xff]
        %v394 = vld [vmem:[%s380 + $0x18] sm:$0xff]
        %v395 = vld [vmem:[%s329] sm:$0xff]
        %v396 = vld [vmem:[%s329 + $0x8] sm:$0xff]
        %v397 = vld [vmem:[%s329 + $0x10] sm:$0xff]
        %v398 = vld [vmem:[%s329 + $0x18] sm:$0xff]
        %399 = vrot.lane.b32.xlu0 %v395, 17
        %v400 = vpop.permute.xlu0 %399
        %401 = vrot.lane.b32.xlu0 %v397, 17
        %v402 = vpop.permute.xlu0 %401
        %403 = vrot.lane.b32.xlu0 %v396, 17
        %v404 = vpop.permute.xlu0 %403
        %405 = vrot.lane.b32.xlu0 %v398, 17
        %v406 = vpop.permute.xlu0 %405
        %v407 = vlaneseq
        %v408 = vand.u32 %v407, 127
        %vm409 = vcmp.lt.s32.totalorder %v408, 17
        %v410 = vsel %vm409, %v400, %v404
        %v411 = vsel %vm409, %v402, %v406
        %v412 = vsel %vm409, %v404, %v400
        %v413 = vsel %vm409, %v406, %v402
        %v415 = vrot.slane %v390, 6
        %v416 = vrot.slane %v415, 4
        %v418 = vmul.f32 %v390, %v416
        %v420 = vlaneseq
        %v421 = vshrl.u32 %v420, 7
        %v422 = vsub.s32 0, %v421
        %v423 = vrot.slane %v418, %v422
        %v424 = vlaneseq
        %v425 = vshrl.u32 %v424, 7
        %v426 = vsub.s32 4, %v425
        %v427 = vrot.slane %v418, %v426
        %v430 = vlaneseq
        %v431 = vshrl.u32 %v430, 7
        %v432 = vsub.s32 0, %v431
        %v433 = vrot.slane %v423, %v432
        %v434 = vlaneseq
        %v435 = vshrl.u32 %v434, 7
        %v436 = vsub.s32 0, %v435
        %v437 = vrot.slane %v427, %v436
        %v438 = vmul.f32 %v412, %v433
        %v439 = vmul.f32 %v410, %v437
        %v440 = vmul.f32 %v413, %v433
        %v441 = vmul.f32 %v411, %v437
        %v442 = vpack.c.bf16 %v440, %v438
        %v443 = vpack.c.bf16 %v441, %v439
        %444 = vst [vmem:[#allocation2] sm:$0xff] %v442
        %445 = vst [vmem:[#allocation2 + $0x8] sm:$0xff] %v443
        %446 = vrot.lane.b32.xlu0 %v395, 16
        %v447 = vpop.permute.xlu0 %446
        %448 = vrot.lane.b32.xlu0 %v397, 16
        %v449 = vpop.permute.xlu0 %448
        %450 = vrot.lane.b32.xlu0 %v396, 16
        %v451 = vpop.permute.xlu0 %450
        %452 = vrot.lane.b32.xlu0 %v398, 16
        %v453 = vpop.permute.xlu0 %452
        %vm454 = vcmp.lt.s32.totalorder %v408, 16
        %v455 = vsel %vm454, %v447, %v451
        %v456 = vsel %vm454, %v449, %v453
        %v457 = vsel %vm454, %v451, %v447
        %v458 = vsel %vm454, %v453, %v449
        %v459 = vlaneseq
        %v460 = vshrl.u32 %v459, 7
        %v461 = vsub.s32 2, %v460
        %v462 = vrot.slane %v390, %v461
        %v463 = vlaneseq
        %v464 = vshrl.u32 %v463, 7
        %v465 = vsub.s32 6, %v464
        %v466 = vrot.slane %v390, %v465
        %v469 = vlaneseq
        %v470 = vshrl.u32 %v469, 7
        %v471 = vsub.s32 2, %v470
        %v472 = vrot.slane %v462, %v471
        %v473 = vlaneseq
        %v474 = vshrl.u32 %v473, 7
        %v475 = vsub.s32 2, %v474
        %v476 = vrot.slane %v466, %v475
        %v477 = vmul.f32 %v457, %v472
        %v478 = vmul.f32 %v455, %v476
        %v479 = vmul.f32 %v458, %v472
        %v480 = vmul.f32 %v456, %v476
        %v481 = vpack.c.bf16 %v479, %v477
        %v482 = vpack.c.bf16 %v480, %v478
        %483 = vst [vmem:[#allocation2 + $0x10] sm:$0xff] %v481
        %484 = vst [vmem:[#allocation2 + $0x18] sm:$0xff] %v482
        %485 = vrot.lane.b32.xlu0 %v395, 15
        %v486 = vpop.permute.xlu0 %485
        %487 = vrot.lane.b32.xlu0 %v397, 15
        %v488 = vpop.permute.xlu0 %487
        %489 = vrot.lane.b32.xlu0 %v396, 15
        %v490 = vpop.permute.xlu0 %489
        %491 = vrot.lane.b32.xlu0 %v398, 15
        %v492 = vpop.permute.xlu0 %491
        %vm493 = vcmp.lt.s32.totalorder %v408, 15
        %v494 = vsel %vm493, %v486, %v490
        %v495 = vsel %vm493, %v488, %v492
        %v496 = vsel %vm493, %v490, %v486
        %v497 = vsel %vm493, %v492, %v488
        %v498 = vrot.slane %v390, 5
        %v499 = vrot.slane %v498, 4
        %v501 = vmul.f32 %v390, %v499
        %v503 = vlaneseq
        %v504 = vshrl.u32 %v503, 7
        %v505 = vsub.s32 1, %v504
        %v506 = vrot.slane %v501, %v505
        %v507 = vlaneseq
        %v508 = vshrl.u32 %v507, 7
        %v509 = vsub.s32 5, %v508
        %v510 = vrot.slane %v501, %v509
        %v513 = vlaneseq
        %v514 = vshrl.u32 %v513, 7
        %v515 = vsub.s32 1, %v514
        %v516 = vrot.slane %v506, %v515
        %v517 = vlaneseq
        %v518 = vshrl.u32 %v517, 7
        %v519 = vsub.s32 1, %v518
        %v520 = vrot.slane %v510, %v519
        %v521 = vmul.f32 %v496, %v516
        %v522 = vmul.f32 %v494, %v520
        %v523 = vmul.f32 %v497, %v516
        %v524 = vmul.f32 %v495, %v520
        %v525 = vpack.c.bf16 %v523, %v521
        %v526 = vpack.c.bf16 %v524, %v522
        %527 = vst [vmem:[#allocation2 + $0x20] sm:$0xff] %v525
        %528 = vst [vmem:[#allocation2 + $0x28] sm:$0xff] %v526
        %529 = vrot.lane.b32.xlu0 %v395, 1
        %v530 = vpop.permute.xlu0 %529
        %531 = vrot.lane.b32.xlu0 %v397, 1
        %v532 = vpop.permute.xlu0 %531
        %533 = vrot.lane.b32.xlu0 %v396, 1
        %v534 = vpop.permute.xlu0 %533
        %535 = vrot.lane.b32.xlu0 %v398, 1
        %v536 = vpop.permute.xlu0 %535
        %vm537 = vcmp.lt.s32.totalorder %v408, 1
        %v538 = vsel %vm537, %v530, %v534
        %v539 = vsel %vm537, %v532, %v536
        %v540 = vsel %vm537, %v534, %v530
        %v541 = vsel %vm537, %v536, %v532
        %v542 = vlaneseq
        %v543 = vshrl.u32 %v542, 7
        %v544 = vsub.s32 0, %v543
        %v545 = vrot.slane %v390, %v544
        %v546 = vlaneseq
        %v547 = vshrl.u32 %v546, 7
        %v548 = vsub.s32 4, %v547
        %v549 = vrot.slane %v390, %v548
        %v552 = vlaneseq
        %v553 = vshrl.u32 %v552, 7
        %v554 = vsub.s32 0, %v553
        %v555 = vrot.slane %v545, %v554
        %v556 = vlaneseq
        %v557 = vshrl.u32 %v556, 7
        %v558 = vsub.s32 0, %v557
        %v559 = vrot.slane %v549, %v558
        %v560 = vmul.f32 %v540, %v555
        %v561 = vmul.f32 %v538, %v559
        %v562 = vmul.f32 %v541, %v555
        %v563 = vmul.f32 %v539, %v559
        %v564 = vpack.c.bf16 %v562, %v560
        %v565 = vpack.c.bf16 %v563, %v561
        %566 = vst [vmem:[#allocation2 + $0x30] sm:$0xff] %v564
        %567 = vst [vmem:[#allocation2 + $0x38] sm:$0xff] %v565
        %v568 = vpack.c.bf16 %v397, %v395
        %v569 = vpack.c.bf16 %v398, %v396
        %570 = vst [vmem:[#allocation2 + $0x40] sm:$0xff] %v568
        %571 = vst [vmem:[#allocation2 + $0x48] sm:$0xff] %v569
        %572 = vrot.lane.b32.xlu0 %v395, 127
        %v573 = vpop.permute.xlu0 %572
        %574 = vrot.lane.b32.xlu0 %v397, 127
        %v575 = vpop.permute.xlu0 %574
        %576 = vrot.lane.b32.xlu0 %v396, 127
        %v577 = vpop.permute.xlu0 %576
        %578 = vrot.lane.b32.xlu0 %v398, 127
        %v579 = vpop.permute.xlu0 %578
        %vm580 = vcmp.lt.s32.totalorder %v408, 127
        %v581 = vsel %vm580, %v573, %v577
        %v582 = vsel %vm580, %v575, %v579
        %v583 = vsel %vm580, %v577, %v573
        %v584 = vsel %vm580, %v579, %v575
        %v585 = vlaneseq
        %v586 = vshrl.u32 %v585, 7
        %v587 = vsub.s32 1, %v586
        %v588 = vrot.slane %v390, %v587
        %v589 = vlaneseq
        %v590 = vshrl.u32 %v589, 7
        %v591 = vsub.s32 5, %v590
        %v592 = vrot.slane %v390, %v591
        %v595 = vlaneseq
        %v596 = vshrl.u32 %v595, 7
        %v597 = vsub.s32 1, %v596
        %v598 = vrot.slane %v588, %v597
        %v599 = vlaneseq
        %v600 = vshrl.u32 %v599, 7
        %v601 = vsub.s32 1, %v600
        %v602 = vrot.slane %v592, %v601
        %v603 = vmul.f32 %v581, %v598
        %v604 = vmul.f32 %v583, %v602
        %v605 = vmul.f32 %v582, %v598
        %v606 = vmul.f32 %v584, %v602
        %v607 = vpack.c.bf16 %v605, %v603
        %v608 = vpack.c.bf16 %v606, %v604
        %609 = vst [vmem:[#allocation2 + $0x50] sm:$0xff] %v607
        %610 = vst [vmem:[#allocation2 + $0x58] sm:$0xff] %v608
        %611 = vrot.lane.b32.xlu0 %v395, 113
        %v612 = vpop.permute.xlu0 %611
        %613 = vrot.lane.b32.xlu0 %v397, 113
        %v614 = vpop.permute.xlu0 %613
        %615 = vrot.lane.b32.xlu0 %v396, 113
        %v616 = vpop.permute.xlu0 %615
        %617 = vrot.lane.b32.xlu0 %v398, 113
        %v618 = vpop.permute.xlu0 %617
        %vm619 = vcmp.lt.s32.totalorder %v408, 113
        %v620 = vsel %vm619, %v612, %v616
        %v621 = vsel %vm619, %v614, %v618
        %v622 = vsel %vm619, %v616, %v612
        %v623 = vsel %vm619, %v618, %v614
        %v624 = vrot.slane %v390, 7
        %v625 = vrot.slane %v624, 4
        %v627 = vmul.f32 %v390, %v625
        %v629 = vlaneseq
        %v630 = vshrl.u32 %v629, 7
        %v631 = vsub.s32 0, %v630
        %v632 = vrot.slane %v627, %v631
        %v633 = vlaneseq
        %v634 = vshrl.u32 %v633, 7
        %v635 = vsub.s32 4, %v634
        %v636 = vrot.slane %v627, %v635
        %v639 = vlaneseq
        %v640 = vshrl.u32 %v639, 7
        %v641 = vsub.s32 0, %v640
        %v642 = vrot.slane %v632, %v641
        %v643 = vlaneseq
        %v644 = vshrl.u32 %v643, 7
        %v645 = vsub.s32 0, %v644
        %v646 = vrot.slane %v636, %v645
        %v647 = vmul.f32 %v620, %v642
        %v648 = vmul.f32 %v622, %v646
        %v649 = vmul.f32 %v621, %v642
        %v650 = vmul.f32 %v623, %v646
        %v651 = vpack.c.bf16 %v649, %v647
        %v652 = vpack.c.bf16 %v650, %v648
        %653 = vst [vmem:[#allocation2 + $0x60] sm:$0xff] %v651
        %654 = vst [vmem:[#allocation2 + $0x68] sm:$0xff] %v652
        %655 = vrot.lane.b32.xlu0 %v395, 112
        %v656 = vpop.permute.xlu0 %655
        %657 = vrot.lane.b32.xlu0 %v397, 112
        %v658 = vpop.permute.xlu0 %657
        %659 = vrot.lane.b32.xlu0 %v396, 112
        %v660 = vpop.permute.xlu0 %659
        %661 = vrot.lane.b32.xlu0 %v398, 112
        %v662 = vpop.permute.xlu0 %661
        %vm663 = vcmp.lt.s32.totalorder %v408, 112
        %v664 = vsel %vm663, %v656, %v660
        %v665 = vsel %vm663, %v658, %v662
        %v666 = vsel %vm663, %v660, %v656
        %v667 = vsel %vm663, %v662, %v658
        %v668 = vlaneseq
        %v669 = vshrl.u32 %v668, 7
        %v670 = vsub.s32 3, %v669
        %v671 = vrot.slane %v390, %v670
        %v672 = vlaneseq
        %v673 = vshrl.u32 %v672, 7
        %v674 = vsub.s32 7, %v673
        %v675 = vrot.slane %v390, %v674
        %v678 = vlaneseq
        %v679 = vshrl.u32 %v678, 7
        %v680 = vsub.s32 3, %v679
        %v681 = vrot.slane %v671, %v680
        %v682 = vlaneseq
        %v683 = vshrl.u32 %v682, 7
        %v684 = vsub.s32 3, %v683
        %v685 = vrot.slane %v675, %v684
        %v686 = vmul.f32 %v664, %v681
        %v687 = vmul.f32 %v666, %v685
        %v688 = vmul.f32 %v665, %v681
        %v689 = vmul.f32 %v667, %v685
        %v690 = vpack.c.bf16 %v688, %v686
        %v691 = vpack.c.bf16 %v689, %v687
        %692 = vst [vmem:[#allocation2 + $0x70] sm:$0xff] %v690
        %693 = vst [vmem:[#allocation2 + $0x78] sm:$0xff] %v691
        %694 = vrot.lane.b32.xlu0 %v395, 111
        %v695 = vpop.permute.xlu0 %694
        %696 = vrot.lane.b32.xlu0 %v397, 111
        %v697 = vpop.permute.xlu0 %696
        %698 = vrot.lane.b32.xlu0 %v396, 111
        %v699 = vpop.permute.xlu0 %698
        %700 = vrot.lane.b32.xlu0 %v398, 111
        %v701 = vpop.permute.xlu0 %700
        %vm702 = vcmp.lt.s32.totalorder %v408, 111
        %v703 = vsel %vm702, %v695, %v699
        %v704 = vsel %vm702, %v697, %v701
        %v705 = vsel %vm702, %v699, %v695
        %v706 = vsel %vm702, %v701, %v697
        %v707 = vlaneseq
        %v708 = vshrl.u32 %v707, 7
        %v709 = vsub.s32 1, %v708
        %v710 = vrot.slane %v418, %v709
        %v711 = vlaneseq
        %v712 = vshrl.u32 %v711, 7
        %v713 = vsub.s32 5, %v712
        %v714 = vrot.slane %v418, %v713
        %v717 = vlaneseq
        %v718 = vshrl.u32 %v717, 7
        %v719 = vsub.s32 1, %v718
        %v720 = vrot.slane %v710, %v719
        %v721 = vlaneseq
        %v722 = vshrl.u32 %v721, 7
        %v723 = vsub.s32 1, %v722
        %v724 = vrot.slane %v714, %v723
        %v725 = vmul.f32 %v703, %v720
        %v726 = vmul.f32 %v705, %v724
        %v727 = vmul.f32 %v704, %v720
        %v728 = vmul.f32 %v706, %v724
        %v729 = vpack.c.bf16 %v727, %v725
        %v730 = vpack.c.bf16 %v728, %v726
        %731 = vst [vmem:[#allocation2 + $0x80] sm:$0xff] %v729
        %732 = vst [vmem:[#allocation2 + $0x88] sm:$0xff] %v730
        %v733 = vld [vmem:[%s3] sm:$0xff]
        %v734 = vld [vmem:[%s3 + $0x8] sm:$0xff]
        %v735 = vld [vmem:[%s3 + $0x10] sm:$0xff]
        %v736 = vld [vmem:[%s3 + $0x18] sm:$0xff]
        %v737 = vld [vmem:[#allocation2] sm:$0xff]
        %v738 = vld [vmem:[#allocation2 + $0x8] sm:$0xff]
        %v739 = vld [vmem:[#allocation2 + $0x10] sm:$0xff]
        %v740 = vld [vmem:[#allocation2 + $0x18] sm:$0xff]
        %v741 = vld [vmem:[#allocation2 + $0x20] sm:$0xff]
        %v742 = vld [vmem:[#allocation2 + $0x28] sm:$0xff]
        %v743 = vld [vmem:[#allocation2 + $0x30] sm:$0xff]
        %v744 = vld [vmem:[#allocation2 + $0x38] sm:$0xff]
        %v745 = vld [vmem:[#allocation2 + $0x40] sm:$0xff]
        %v746 = vld [vmem:[#allocation2 + $0x48] sm:$0xff]
        %v747 = vld [vmem:[#allocation2 + $0x50] sm:$0xff]
        %v748 = vld [vmem:[#allocation2 + $0x58] sm:$0xff]
        %v749 = vld [vmem:[#allocation2 + $0x60] sm:$0xff]
        %v750 = vld [vmem:[#allocation2 + $0x68] sm:$0xff]
        %v751 = vld [vmem:[#allocation2 + $0x70] sm:$0xff]
        %v752 = vld [vmem:[#allocation2 + $0x78] sm:$0xff]
        %v753 = vld [vmem:[#allocation2 + $0x80] sm:$0xff]
        %v754 = vld [vmem:[#allocation2 + $0x88] sm:$0xff]
        %v759 = vunpack.c.l.b16 %v733
        %v760 = vunpack.c.h.b16 %v733
        %v761 = vunpack.c.l.b16 %v734
        %v762 = vunpack.c.h.b16 %v734
        %v763 = vunpack.c.l.b16 %v735
        %v764 = vunpack.c.h.b16 %v735
        %v765 = vunpack.c.l.b16 %v736
        %v766 = vunpack.c.h.b16 %v736
        %v767 = vpack.c.b16 %v761, %v759
        %v768 = vpack.c.b16 %v762, %v760
        %v769 = vpack.c.b16 %v765, %v763
        %v770 = vpack.c.b16 %v766, %v764
        %vm773 = vcmask 130048
        %v775 = vsel %vm773, %v768, 0
        %v778 = vsel %vm773, %v770, 0
        %780 = vmatprep.subr.bf16.mxu0 %v738
        %781 = vmatpush1.bf16.msra.mxu0 %v737
        %782 = vmatprep.subr.bf16.mxu0 %v740
        %783 = vmatpush1.bf16.msra.mxu0 %v739
        %784 = vmatprep.subr.bf16.mxu0 %v742
        %785 = vmatpush1.bf16.msra.mxu0 %v741
        %786 = vmatprep.subr.bf16.mxu0 %v744
        %787 = vmatpush1.bf16.msra.mxu0 %v743
        %788 = vmatprep.subr.bf16.mxu0 %v746
        %789 = vmatpush1.bf16.msra.mxu0 %v745
        %790 = vmatprep.subr.bf16.mxu0 %v748
        %791 = vmatpush1.bf16.msra.mxu0 %v747
        %792 = vmatprep.subr.bf16.mxu0 %v750
        %793 = vmatpush1.bf16.msra.mxu0 %v749
        %794 = vmatprep.subr.bf16.mxu0 %v752
        %795 = vmatpush1.bf16.msra.mxu0 %v751
        %796 = vmatprep.subr.bf16.mxu0 %v754
        %797 = vmatpush1.bf16.msra.mxu0 %v753
        %798 = vmatprep.subr.bf16.mxu0 0
        %799 = vmatpush1.bf16.msra.mxu0 0
        %800 = vmatprep.subr.bf16.mxu0 0
        %801 = vmatpush1.bf16.msra.mxu0 0
        %802 = vmatprep.subr.bf16.mxu0 0
        %803 = vmatpush1.bf16.msra.mxu0 0
        %804 = vmatprep.subr.bf16.mxu0 0
        %805 = vmatpush1.bf16.msra.mxu0 0
        %806 = vmatprep.subr.bf16.mxu0 0
        %807 = vmatpush1.bf16.msra.mxu0 0
        %808 = vmatprep.subr.bf16.mxu0 0
        %809 = vmatpush1.bf16.msra.mxu0 0
        %810 = vmatprep.subr.bf16.mxu0 0
        %811 = vmatpush1.bf16.msra.mxu0 0
        %812 = vmatprep.mubr.bf16.mxu0 %v775
        %813 = vmatmul.mubr.bf16.gmra.mrb[0].mxu0 %v767
        %v814 = vpop.f32.mrb[0].mxu0
        %v815 = vadd.f32 0.0, %v814
        %v816 = vpop.f32.mrb[0].mxu0
        %v817 = vadd.f32 0.0, %v816
        %v818 = vpop.f32.mrb[0].mxu0
        %v819 = vadd.f32 0.0, %v818
        %v820 = vpop.f32.mrb[0].mxu0
        %v821 = vadd.f32 0.0, %v820
        %822 = vmatprep.mubr.bf16.mxu0 %v778
        %823 = vmatmul.mubr.bf16.gmra.mrb[0].mxu0 %v769
        %v824 = vpop.f32.mrb[0].mxu0
        %v825 = vadd.f32 0.0, %v824
        %v826 = vpop.f32.mrb[0].mxu0
        %v827 = vadd.f32 0.0, %v826
        %v828 = vpop.f32.mrb[0].mxu0
        %v829 = vadd.f32 0.0, %v828
        %v830 = vpop.f32.mrb[0].mxu0
        %v831 = vadd.f32 0.0, %v830
        %832 = vdwg.mxu0
        %834 = vset.pattern.permute.xlu0 0
        %835 = vperm.xlu0 %834, %v391
        %v836 = vpop.permute.xlu0 %835
        %839 = vset.pattern.permute.xlu0 0
        %840 = vperm.xlu0 %839, %v392
        %v841 = vpop.permute.xlu0 %840
        %844 = vset.pattern.permute.xlu0 0
        %845 = vperm.xlu0 %844, %v393
        %v846 = vpop.permute.xlu0 %845
        %849 = vset.pattern.permute.xlu0 0
        %850 = vperm.xlu0 %849, %v394
        %v851 = vpop.permute.xlu0 %850
        %v853 = vmul.f32 %v815, %v836
        %v854 = vmul.f32 %v817, %v836
        %v855 = vmul.f32 %v819, %v841
        %v856 = vmul.f32 %v821, %v841
        %v857 = vmul.f32 %v825, %v846
        %v858 = vmul.f32 %v827, %v846
        %v859 = vmul.f32 %v829, %v851
        %v860 = vmul.f32 %v831, %v851
        %861 = vset.pattern.permute.xlu0 1
        %862 = vperm.xlu0 %861, %v391
        %v863 = vpop.permute.xlu0 %862
        %865 = vset.pattern.permute.xlu0 1
        %866 = vperm.xlu0 %865, %v392
        %v867 = vpop.permute.xlu0 %866
        %869 = vset.pattern.permute.xlu0 1
        %870 = vperm.xlu0 %869, %v393
        %v871 = vpop.permute.xlu0 %870
        %873 = vset.pattern.permute.xlu0 1
        %874 = vperm.xlu0 %873, %v394
        %v875 = vpop.permute.xlu0 %874
        %v877 = vadd.f32 %v853, %v863
        %v878 = vadd.f32 %v854, %v863
        %v879 = vadd.f32 %v855, %v867
        %v880 = vadd.f32 %v856, %v867
        %v881 = vadd.f32 %v857, %v871
        %v882 = vadd.f32 %v858, %v871
        %v883 = vadd.f32 %v859, %v875
        %v884 = vadd.f32 %v860, %v875
        %vm885 = vcmp.ge.f32.partialorder %v877, 0.0
        %vm886 = vcmp.ge.f32.partialorder %v878, 0.0
        %vm887 = vcmp.ge.f32.partialorder %v879, 0.0
        %vm888 = vcmp.ge.f32.partialorder %v880, 0.0
        %vm889 = vcmp.ge.f32.partialorder %v881, 0.0
        %vm890 = vcmp.ge.f32.partialorder %v882, 0.0
        %vm891 = vcmp.ge.f32.partialorder %v883, 0.0
        %vm892 = vcmp.ge.f32.partialorder %v884, 0.0
        %v893 = vstv %s388
        %v894 = vmul.f32 %v893, %v877
        %v895 = vmul.f32 %v893, %v878
        %v896 = vmul.f32 %v893, %v879
        %v897 = vmul.f32 %v893, %v880
        %v898 = vmul.f32 %v893, %v881
        %v899 = vmul.f32 %v893, %v882
        %v900 = vmul.f32 %v893, %v883
        %v901 = vmul.f32 %v893, %v884
        %v902 = vsel %vm885, %v877, %v894
        %v903 = vsel %vm886, %v878, %v895
        %v904 = vsel %vm887, %v879, %v896
        %v905 = vsel %vm888, %v880, %v897
        %v906 = vsel %vm889, %v881, %v898
        %v907 = vsel %vm890, %v882, %v899
        %v908 = vsel %vm891, %v883, %v900
        %v909 = vsel %vm892, %v884, %v901
        %910 = vst [vmem:[#allocation4] sm:$0xff] %v902
        %911 = vst [vmem:[#allocation4 + $0x8] sm:$0xff] %v903
        %912 = vst [vmem:[#allocation4 + $0x10] sm:$0xff] %v904
        %913 = vst [vmem:[#allocation4 + $0x18] sm:$0xff] %v905
        %914 = vst [vmem:[#allocation4 + $0x20] sm:$0xff] %v906
        %915 = vst [vmem:[#allocation4 + $0x28] sm:$0xff] %v907
        %916 = vst [vmem:[#allocation4 + $0x30] sm:$0xff] %v908
        %917 = vst [vmem:[#allocation4 + $0x38] sm:$0xff] %v909
        %v918 = vld [vmem:[#allocation4] sm:$0xff]
        %v919 = vld [vmem:[#allocation4 + $0x8] sm:$0xff]
        %v920 = vld [vmem:[#allocation4 + $0x10] sm:$0xff]
        %v921 = vld [vmem:[#allocation4 + $0x18] sm:$0xff]
        %v922 = vld [vmem:[#allocation4 + $0x20] sm:$0xff]
        %v923 = vld [vmem:[#allocation4 + $0x28] sm:$0xff]
        %v924 = vld [vmem:[#allocation4 + $0x30] sm:$0xff]
        %v925 = vld [vmem:[#allocation4 + $0x38] sm:$0xff]
        %926 = vrot.lane.b32.xlu0 %v918, 17
        %v927 = vpop.permute.xlu0 %926
        %928 = vrot.lane.b32.xlu0 %v920, 17
        %v929 = vpop.permute.xlu0 %928
        %930 = vrot.lane.b32.xlu0 %v922, 17
        %v931 = vpop.permute.xlu0 %930
        %932 = vrot.lane.b32.xlu0 %v924, 17
        %v933 = vpop.permute.xlu0 %932
        %934 = vrot.lane.b32.xlu0 %v919, 17
        %v935 = vpop.permute.xlu0 %934
        %936 = vrot.lane.b32.xlu0 %v921, 17
        %v937 = vpop.permute.xlu0 %936
        %938 = vrot.lane.b32.xlu0 %v923, 17
        %v939 = vpop.permute.xlu0 %938
        %940 = vrot.lane.b32.xlu0 %v925, 17
        %v941 = vpop.permute.xlu0 %940
        %v942 = vsel %vm409, %v927, %v935
        %v943 = vsel %vm409, %v929, %v937
        %v944 = vsel %vm409, %v931, %v939
        %v945 = vsel %vm409, %v933, %v941
        %v946 = vsel %vm409, %v935, %v927
        %v947 = vsel %vm409, %v937, %v929
        %v948 = vsel %vm409, %v939, %v931
        %v949 = vsel %vm409, %v941, %v933
        %v950 = vmul.f32 %v946, %v433
        %v951 = vmul.f32 %v942, %v437
        %v952 = vmul.f32 %v947, %v433
        %v953 = vmul.f32 %v943, %v437
        %v954 = vmul.f32 %v948, %v433
        %v955 = vmul.f32 %v944, %v437
        %v956 = vmul.f32 %v949, %v433
        %v957 = vmul.f32 %v945, %v437
        %v958 = vpack.c.bf16 %v952, %v950
        %v959 = vpack.c.bf16 %v953, %v951
        %v960 = vpack.c.bf16 %v956, %v954
        %v961 = vpack.c.bf16 %v957, %v955
        %962 = vst [vmem:[#allocation3] sm:$0xff] %v958
        %963 = vst [vmem:[#allocation3 + $0x8] sm:$0xff] %v959
        %964 = vst [vmem:[#allocation3 + $0x10] sm:$0xff] %v960
        %965 = vst [vmem:[#allocation3 + $0x18] sm:$0xff] %v961
        %966 = vrot.lane.b32.xlu0 %v918, 16
        %v967 = vpop.permute.xlu0 %966
        %968 = vrot.lane.b32.xlu0 %v920, 16
        %v969 = vpop.permute.xlu0 %968
        %970 = vrot.lane.b32.xlu0 %v922, 16
        %v971 = vpop.permute.xlu0 %970
        %972 = vrot.lane.b32.xlu0 %v924, 16
        %v973 = vpop.permute.xlu0 %972
        %974 = vrot.lane.b32.xlu0 %v919, 16
        %v975 = vpop.permute.xlu0 %974
        %976 = vrot.lane.b32.xlu0 %v921, 16
        %v977 = vpop.permute.xlu0 %976
        %978 = vrot.lane.b32.xlu0 %v923, 16
        %v979 = vpop.permute.xlu0 %978
        %980 = vrot.lane.b32.xlu0 %v925, 16
        %v981 = vpop.permute.xlu0 %980
        %v982 = vsel %vm454, %v967, %v975
        %v983 = vsel %vm454, %v969, %v977
        %v984 = vsel %vm454, %v971, %v979
        %v985 = vsel %vm454, %v973, %v981
        %v986 = vsel %vm454, %v975, %v967
        %v987 = vsel %vm454, %v977, %v969
        %v988 = vsel %vm454, %v979, %v971
        %v989 = vsel %vm454, %v981, %v973
        %v990 = vmul.f32 %v986, %v472
        %v991 = vmul.f32 %v982, %v476
        %v992 = vmul.f32 %v987, %v472
        %v993 = vmul.f32 %v983, %v476
        %v994 = vmul.f32 %v988, %v472
        %v995 = vmul.f32 %v984, %v476
        %v996 = vmul.f32 %v989, %v472
        %v997 = vmul.f32 %v985, %v476
        %v998 = vpack.c.bf16 %v992, %v990
        %v999 = vpack.c.bf16 %v993, %v991
        %v1000 = vpack.c.bf16 %v996, %v994
        %v1001 = vpack.c.bf16 %v997, %v995
        %1002 = vst [vmem:[#allocation3 + $0x20] sm:$0xff] %v998
        %1003 = vst [vmem:[#allocation3 + $0x28] sm:$0xff] %v999
        %1004 = vst [vmem:[#allocation3 + $0x30] sm:$0xff] %v1000
        %1005 = vst [vmem:[#allocation3 + $0x38] sm:$0xff] %v1001
        %1006 = vrot.lane.b32.xlu0 %v918, 15
        %v1007 = vpop.permute.xlu0 %1006
        %1008 = vrot.lane.b32.xlu0 %v920, 15
        %v1009 = vpop.permute.xlu0 %1008
        %1010 = vrot.lane.b32.xlu0 %v922, 15
        %v1011 = vpop.permute.xlu0 %1010
        %1012 = vrot.lane.b32.xlu0 %v924, 15
        %v1013 = vpop.permute.xlu0 %1012
        %1014 = vrot.lane.b32.xlu0 %v919, 15
        %v1015 = vpop.permute.xlu0 %1014
        %1016 = vrot.lane.b32.xlu0 %v921, 15
        %v1017 = vpop.permute.xlu0 %1016
        %1018 = vrot.lane.b32.xlu0 %v923, 15
        %v1019 = vpop.permute.xlu0 %1018
        %1020 = vrot.lane.b32.xlu0 %v925, 15
        %v1021 = vpop.permute.xlu0 %1020
        %v1022 = vsel %vm493, %v1007, %v1015
        %v1023 = vsel %vm493, %v1009, %v1017
        %v1024 = vsel %vm493, %v1011, %v1019
        %v1025 = vsel %vm493, %v1013, %v1021
        %v1026 = vsel %vm493, %v1015, %v1007
        %v1027 = vsel %vm493, %v1017, %v1009
        %v1028 = vsel %vm493, %v1019, %v1011
        %v1029 = vsel %vm493, %v1021, %v1013
        %v1030 = vmul.f32 %v1026, %v516
        %v1031 = vmul.f32 %v1022, %v520
        %v1032 = vmul.f32 %v1027, %v516
        %v1033 = vmul.f32 %v1023, %v520
        %v1034 = vmul.f32 %v1028, %v516
        %v1035 = vmul.f32 %v1024, %v520
        %v1036 = vmul.f32 %v1029, %v516
        %v1037 = vmul.f32 %v1025, %v520
        %v1038 = vpack.c.bf16 %v1032, %v1030
        %v1039 = vpack.c.bf16 %v1033, %v1031
        %v1040 = vpack.c.bf16 %v1036, %v1034
        %v1041 = vpack.c.bf16 %v1037, %v1035
        %1042 = vst [vmem:[#allocation3 + $0x40] sm:$0xff] %v1038
        %1043 = vst [vmem:[#allocation3 + $0x48] sm:$0xff] %v1039
        %1044 = vst [vmem:[#allocation3 + $0x50] sm:$0xff] %v1040
        %1045 = vst [vmem:[#allocation3 + $0x58] sm:$0xff] %v1041
        %1046 = vrot.lane.b32.xlu0 %v918, 1
        %v1047 = vpop.permute.xlu0 %1046
        %1048 = vrot.lane.b32.xlu0 %v920, 1
        %v1049 = vpop.permute.xlu0 %1048
        %1050 = vrot.lane.b32.xlu0 %v922, 1
        %v1051 = vpop.permute.xlu0 %1050
        %1052 = vrot.lane.b32.xlu0 %v924, 1
        %v1053 = vpop.permute.xlu0 %1052
        %1054 = vrot.lane.b32.xlu0 %v919, 1
        %v1055 = vpop.permute.xlu0 %1054
        %1056 = vrot.lane.b32.xlu0 %v921, 1
        %v1057 = vpop.permute.xlu0 %1056
        %1058 = vrot.lane.b32.xlu0 %v923, 1
        %v1059 = vpop.permute.xlu0 %1058
        %1060 = vrot.lane.b32.xlu0 %v925, 1
        %v1061 = vpop.permute.xlu0 %1060
        %v1062 = vsel %vm537, %v1047, %v1055
        %v1063 = vsel %vm537, %v1049, %v1057
        %v1064 = vsel %vm537, %v1051, %v1059
        %v1065 = vsel %vm537, %v1053, %v1061
        %v1066 = vsel %vm537, %v1055, %v1047
        %v1067 = vsel %vm537, %v1057, %v1049
        %v1068 = vsel %vm537, %v1059, %v1051
        %v1069 = vsel %vm537, %v1061, %v1053
        %v1070 = vmul.f32 %v1066, %v555
        %v1071 = vmul.f32 %v1062, %v559
        %v1072 = vmul.f32 %v1067, %v555
        %v1073 = vmul.f32 %v1063, %v559
        %v1074 = vmul.f32 %v1068, %v555
        %v1075 = vmul.f32 %v1064, %v559
        %v1076 = vmul.f32 %v1069, %v555
        %v1077 = vmul.f32 %v1065, %v559
        %v1078 = vpack.c.bf16 %v1072, %v1070
        %v1079 = vpack.c.bf16 %v1073, %v1071
        %v1080 = vpack.c.bf16 %v1076, %v1074
        %v1081 = vpack.c.bf16 %v1077, %v1075
        %1082 = vst [vmem:[#allocation3 + $0x60] sm:$0xff] %v1078
        %1083 = vst [vmem:[#allocation3 + $0x68] sm:$0xff] %v1079
        %1084 = vst [vmem:[#allocation3 + $0x70] sm:$0xff] %v1080
        %1085 = vst [vmem:[#allocation3 + $0x78] sm:$0xff] %v1081
        %v1086 = vpack.c.bf16 %v920, %v918
        %v1087 = vpack.c.bf16 %v921, %v919
        %v1088 = vpack.c.bf16 %v924, %v922
        %v1089 = vpack.c.bf16 %v925, %v923
        %1090 = vst [vmem:[#allocation3 + $0x80] sm:$0xff] %v1086
        %1091 = vst [vmem:[#allocation3 + $0x88] sm:$0xff] %v1087
        %1092 = vst [vmem:[#allocation3 + $0x90] sm:$0xff] %v1088
        %1093 = vst [vmem:[#allocation3 + $0x98] sm:$0xff] %v1089
        %1094 = vrot.lane.b32.xlu0 %v918, 127
        %v1095 = vpop.permute.xlu0 %1094
        %1096 = vrot.lane.b32.xlu0 %v920, 127
        %v1097 = vpop.permute.xlu0 %1096
        %1098 = vrot.lane.b32.xlu0 %v922, 127
        %v1099 = vpop.permute.xlu0 %1098
        %1100 = vrot.lane.b32.xlu0 %v924, 127
        %v1101 = vpop.permute.xlu0 %1100
        %1102 = vrot.lane.b32.xlu0 %v919, 127
        %v1103 = vpop.permute.xlu0 %1102
        %1104 = vrot.lane.b32.xlu0 %v921, 127
        %v1105 = vpop.permute.xlu0 %1104
        %1106 = vrot.lane.b32.xlu0 %v923, 127
        %v1107 = vpop.permute.xlu0 %1106
        %1108 = vrot.lane.b32.xlu0 %v925, 127
        %v1109 = vpop.permute.xlu0 %1108
        %v1110 = vsel %vm580, %v1095, %v1103
        %v1111 = vsel %vm580, %v1097, %v1105
        %v1112 = vsel %vm580, %v1099, %v1107
        %v1113 = vsel %vm580, %v1101, %v1109
        %v1114 = vsel %vm580, %v1103, %v1095
        %v1115 = vsel %vm580, %v1105, %v1097
        %v1116 = vsel %vm580, %v1107, %v1099
        %v1117 = vsel %vm580, %v1109, %v1101
        %v1118 = vmul.f32 %v1110, %v598
        %v1119 = vmul.f32 %v1114, %v602
        %v1120 = vmul.f32 %v1111, %v598
        %v1121 = vmul.f32 %v1115, %v602
        %v1122 = vmul.f32 %v1112, %v598
        %v1123 = vmul.f32 %v1116, %v602
        %v1124 = vmul.f32 %v1113, %v598
        %v1125 = vmul.f32 %v1117, %v602
        %v1126 = vpack.c.bf16 %v1120, %v1118
        %v1127 = vpack.c.bf16 %v1121, %v1119
        %v1128 = vpack.c.bf16 %v1124, %v1122
        %v1129 = vpack.c.bf16 %v1125, %v1123
        %1130 = vst [vmem:[#allocation3 + $0xa0] sm:$0xff] %v1126
        %1131 = vst [vmem:[#allocation3 + $0xa8] sm:$0xff] %v1127
        %1132 = vst [vmem:[#allocation3 + $0xb0] sm:$0xff] %v1128
        %1133 = vst [vmem:[#allocation3 + $0xb8] sm:$0xff] %v1129
        %1134 = vrot.lane.b32.xlu0 %v918, 113
        %v1135 = vpop.permute.xlu0 %1134
        %1136 = vrot.lane.b32.xlu0 %v920, 113
        %v1137 = vpop.permute.xlu0 %1136
        %1138 = vrot.lane.b32.xlu0 %v922, 113
        %v1139 = vpop.permute.xlu0 %1138
        %1140 = vrot.lane.b32.xlu0 %v924, 113
        %v1141 = vpop.permute.xlu0 %1140
        %1142 = vrot.lane.b32.xlu0 %v919, 113
        %v1143 = vpop.permute.xlu0 %1142
        %1144 = vrot.lane.b32.xlu0 %v921, 113
        %v1145 = vpop.permute.xlu0 %1144
        %1146 = vrot.lane.b32.xlu0 %v923, 113
        %v1147 = vpop.permute.xlu0 %1146
        %1148 = vrot.lane.b32.xlu0 %v925, 113
        %v1149 = vpop.permute.xlu0 %1148
        %v1150 = vsel %vm619, %v1135, %v1143
        %v1151 = vsel %vm619, %v1137, %v1145
        %v1152 = vsel %vm619, %v1139, %v1147
        %v1153 = vsel %vm619, %v1141, %v1149
        %v1154 = vsel %vm619, %v1143, %v1135
        %v1155 = vsel %vm619, %v1145, %v1137
        %v1156 = vsel %vm619, %v1147, %v1139
        %v1157 = vsel %vm619, %v1149, %v1141
        %v1158 = vmul.f32 %v1150, %v642
        %v1159 = vmul.f32 %v1154, %v646
        %v1160 = vmul.f32 %v1151, %v642
        %v1161 = vmul.f32 %v1155, %v646
        %v1162 = vmul.f32 %v1152, %v642
        %v1163 = vmul.f32 %v1156, %v646
        %v1164 = vmul.f32 %v1153, %v642
        %v1165 = vmul.f32 %v1157, %v646
        %v1166 = vpack.c.bf16 %v1160, %v1158
        %v1167 = vpack.c.bf16 %v1161, %v1159
        %v1168 = vpack.c.bf16 %v1164, %v1162
        %v1169 = vpack.c.bf16 %v1165, %v1163
        %1170 = vst [vmem:[#allocation3 + $0xc0] sm:$0xff] %v1166
        %1171 = vst [vmem:[#allocation3 + $0xc8] sm:$0xff] %v1167
        %1172 = vst [vmem:[#allocation3 + $0xd0] sm:$0xff] %v1168
        %1173 = vst [vmem:[#allocation3 + $0xd8] sm:$0xff] %v1169
        %1174 = vrot.lane.b32.xlu0 %v918, 112
        %v1175 = vpop.permute.xlu0 %1174
        %1176 = vrot.lane.b32.xlu0 %v920, 112
        %v1177 = vpop.permute.xlu0 %1176
        %1178 = vrot.lane.b32.xlu0 %v922, 112
        %v1179 = vpop.permute.xlu0 %1178
        %1180 = vrot.lane.b32.xlu0 %v924, 112
        %v1181 = vpop.permute.xlu0 %1180
        %1182 = vrot.lane.b32.xlu0 %v919, 112
        %v1183 = vpop.permute.xlu0 %1182
        %1184 = vrot.lane.b32.xlu0 %v921, 112
        %v1185 = vpop.permute.xlu0 %1184
        %1186 = vrot.lane.b32.xlu0 %v923, 112
        %v1187 = vpop.permute.xlu0 %1186
        %1188 = vrot.lane.b32.xlu0 %v925, 112
        %v1189 = vpop.permute.xlu0 %1188
        %v1190 = vsel %vm663, %v1175, %v1183
        %v1191 = vsel %vm663, %v1177, %v1185
        %v1192 = vsel %vm663, %v1179, %v1187
        %v1193 = vsel %vm663, %v1181, %v1189
        %v1194 = vsel %vm663, %v1183, %v1175
        %v1195 = vsel %vm663, %v1185, %v1177
        %v1196 = vsel %vm663, %v1187, %v1179
        %v1197 = vsel %vm663, %v1189, %v1181
        %v1198 = vmul.f32 %v1190, %v681
        %v1199 = vmul.f32 %v1194, %v685
        %v1200 = vmul.f32 %v1191, %v681
        %v1201 = vmul.f32 %v1195, %v685
        %v1202 = vmul.f32 %v1192, %v681
        %v1203 = vmul.f32 %v1196, %v685
        %v1204 = vmul.f32 %v1193, %v681
        %v1205 = vmul.f32 %v1197, %v685
        %v1206 = vpack.c.bf16 %v1200, %v1198
        %v1207 = vpack.c.bf16 %v1201, %v1199
        %v1208 = vpack.c.bf16 %v1204, %v1202
        %v1209 = vpack.c.bf16 %v1205, %v1203
        %1210 = vst [vmem:[#allocation3 + $0xe0] sm:$0xff] %v1206
        %1211 = vst [vmem:[#allocation3 + $0xe8] sm:$0xff] %v1207
        %1212 = vst [vmem:[#allocation3 + $0xf0] sm:$0xff] %v1208
        %1213 = vst [vmem:[#allocation3 + $0xf8] sm:$0xff] %v1209
        %1214 = vrot.lane.b32.xlu0 %v918, 111
        %v1215 = vpop.permute.xlu0 %1214
        %1216 = vrot.lane.b32.xlu0 %v920, 111
        %v1217 = vpop.permute.xlu0 %1216
        %1218 = vrot.lane.b32.xlu0 %v922, 111
        %v1219 = vpop.permute.xlu0 %1218
        %1220 = vrot.lane.b32.xlu0 %v924, 111
        %v1221 = vpop.permute.xlu0 %1220
        %1222 = vrot.lane.b32.xlu0 %v919, 111
        %v1223 = vpop.permute.xlu0 %1222
        %1224 = vrot.lane.b32.xlu0 %v921, 111
        %v1225 = vpop.permute.xlu0 %1224
        %1226 = vrot.lane.b32.xlu0 %v923, 111
        %v1227 = vpop.permute.xlu0 %1226
        %1228 = vrot.lane.b32.xlu0 %v925, 111
        %v1229 = vpop.permute.xlu0 %1228
        %v1230 = vsel %vm702, %v1215, %v1223
        %v1231 = vsel %vm702, %v1217, %v1225
        %v1232 = vsel %vm702, %v1219, %v1227
        %v1233 = vsel %vm702, %v1221, %v1229
        %v1234 = vsel %vm702, %v1223, %v1215
        %v1235 = vsel %vm702, %v1225, %v1217
        %v1236 = vsel %vm702, %v1227, %v1219
        %v1237 = vsel %vm702, %v1229, %v1221
        %v1238 = vmul.f32 %v1230, %v720
        %v1239 = vmul.f32 %v1234, %v724
        %v1240 = vmul.f32 %v1231, %v720
        %v1241 = vmul.f32 %v1235, %v724
        %v1242 = vmul.f32 %v1232, %v720
        %v1243 = vmul.f32 %v1236, %v724
        %v1244 = vmul.f32 %v1233, %v720
        %v1245 = vmul.f32 %v1237, %v724
        %v1246 = vpack.c.bf16 %v1240, %v1238
        %v1247 = vpack.c.bf16 %v1241, %v1239
        %v1248 = vpack.c.bf16 %v1244, %v1242
        %v1249 = vpack.c.bf16 %v1245, %v1243
        %1250 = vst [vmem:[#allocation3 + $0x100] sm:$0xff] %v1246
        %1251 = vst [vmem:[#allocation3 + $0x108] sm:$0xff] %v1247
        %1252 = vst [vmem:[#allocation3 + $0x110] sm:$0xff] %v1248
        %1253 = vst [vmem:[#allocation3 + $0x118] sm:$0xff] %v1249
        %v1254 = vld [vmem:[%s4] sm:$0xff]
        %v1255 = vld [vmem:[%s4 + $0x8] sm:$0xf]
        %v1256 = vld [vmem:[%s4 + $0xc] sm:$0xff]
        %v1257 = vld [vmem:[%s4 + $0x14] sm:$0xf]
        %v1258 = vld [vmem:[%s4 + $0x18] sm:$0xff]
        %v1259 = vld [vmem:[%s4 + $0x20] sm:$0xf]
        %v1260 = vld [vmem:[%s4 + $0x24] sm:$0xff]
        %v1261 = vld [vmem:[%s4 + $0x2c] sm:$0xf]
        %v1262 = vld [vmem:[#allocation3] sm:$0xff]
        %v1263 = vld [vmem:[#allocation3 + $0x8] sm:$0xff]
        %v1264 = vld [vmem:[#allocation3 + $0x10] sm:$0xff]
        %v1265 = vld [vmem:[#allocation3 + $0x18] sm:$0xff]
        %v1266 = vld [vmem:[#allocation3 + $0x20] sm:$0xff]
        %v1267 = vld [vmem:[#allocation3 + $0x28] sm:$0xff]
        %v1268 = vld [vmem:[#allocation3 + $0x30] sm:$0xff]
        %v1269 = vld [vmem:[#allocation3 + $0x38] sm:$0xff]
        %v1270 = vld [vmem:[#allocation3 + $0x40] sm:$0xff]
        %v1271 = vld [vmem:[#allocation3 + $0x48] sm:$0xff]
        %v1272 = vld [vmem:[#allocation3 + $0x50] sm:$0xff]
        %v1273 = vld [vmem:[#allocation3 + $0x58] sm:$0xff]
        %v1274 = vld [vmem:[#allocation3 + $0x60] sm:$0xff]
        %v1275 = vld [vmem:[#allocation3 + $0x68] sm:$0xff]
        %v1276 = vld [vmem:[#allocation3 + $0x70] sm:$0xff]
        %v1277 = vld [vmem:[#allocation3 + $0x78] sm:$0xff]
        %v1278 = vld [vmem:[#allocation3 + $0x80] sm:$0xff]
        %v1279 = vld [vmem:[#allocation3 + $0x88] sm:$0xff]
        %v1280 = vld [vmem:[#allocation3 + $0x90] sm:$0xff]
        %v1281 = vld [vmem:[#allocation3 + $0x98] sm:$0xff]
        %v1282 = vld [vmem:[#allocation3 + $0xa0] sm:$0xff]
        %v1283 = vld [vmem:[#allocation3 + $0xa8] sm:$0xff]
        %v1284 = vld [vmem:[#allocation3 + $0xb0] sm:$0xff]
        %v1285 = vld [vmem:[#allocation3 + $0xb8] sm:$0xff]
        %v1286 = vld [vmem:[#allocation3 + $0xc0] sm:$0xff]
        %v1287 = vld [vmem:[#allocation3 + $0xc8] sm:$0xff]
        %v1288 = vld [vmem:[#allocation3 + $0xd0] sm:$0xff]
        %v1289 = vld [vmem:[#allocation3 + $0xd8] sm:$0xff]
        %v1290 = vld [vmem:[#allocation3 + $0xe0] sm:$0xff]
        %v1291 = vld [vmem:[#allocation3 + $0xe8] sm:$0xff]
        %v1292 = vld [vmem:[#allocation3 + $0xf0] sm:$0xff]
        %v1293 = vld [vmem:[#allocation3 + $0xf8] sm:$0xff]
        %v1294 = vld [vmem:[#allocation3 + $0x100] sm:$0xff]
        %v1295 = vld [vmem:[#allocation3 + $0x108] sm:$0xff]
        %v1296 = vld [vmem:[#allocation3 + $0x110] sm:$0xff]
        %v1297 = vld [vmem:[#allocation3 + $0x118] sm:$0xff]
        %v1306 = vunpack.c.l.b16 %v1254
        %v1307 = vunpack.c.h.b16 %v1254
        %v1308 = vunpack.c.l.b16 %v1255
        %v1309 = vunpack.c.l.b16 %v1256
        %v1310 = vunpack.c.h.b16 %v1256
        %v1311 = vunpack.c.l.b16 %v1257
        %v1312 = vunpack.c.l.b16 %v1258
        %v1313 = vunpack.c.h.b16 %v1258
        %v1314 = vunpack.c.l.b16 %v1259
        %v1315 = vunpack.c.l.b16 %v1260
        %v1316 = vunpack.c.h.b16 %v1260
        %v1317 = vunpack.c.l.b16 %v1261
        %v1318 = vpack.c.b16 %v1309, %v1306
        %v1319 = vpack.c.b16 %v1310, %v1307
        %v1320 = vpack.c.b16 %v1311, %v1308
        %v1321 = vpack.c.b16 %v1315, %v1312
        %v1322 = vpack.c.b16 %v1316, %v1313
        %v1323 = vpack.c.b16 %v1317, %v1314
        %vm1328 = vcmask 261120
        %v1330 = vsel %vm1328, %v1320, 0
        %v1333 = vsel %vm1328, %v1323, 0
        %1335 = vmatprep.subr.bf16.mxu0 %v1263
        %1336 = vmatpush1.bf16.msra.mxu0 %v1262
        %1337 = vmatprep.subr.bf16.mxu0 %v1265
        %1338 = vmatpush1.bf16.msra.mxu0 %v1264
        %1339 = vmatprep.subr.bf16.mxu0 %v1267
        %1340 = vmatpush1.bf16.msra.mxu0 %v1266
        %1341 = vmatprep.subr.bf16.mxu0 %v1269
        %1342 = vmatpush1.bf16.msra.mxu0 %v1268
        %1343 = vmatprep.subr.bf16.mxu0 %v1271
        %1344 = vmatpush1.bf16.msra.mxu0 %v1270
        %1345 = vmatprep.subr.bf16.mxu0 %v1273
        %1346 = vmatpush1.bf16.msra.mxu0 %v1272
        %1347 = vmatprep.subr.bf16.mxu0 %v1275
        %1348 = vmatpush1.bf16.msra.mxu0 %v1274
        %1349 = vmatprep.subr.bf16.mxu0 %v1277
        %1350 = vmatpush1.bf16.msra.mxu0 %v1276
        %1351 = vmatprep.subr.bf16.mxu0 %v1279
        %1352 = vmatpush1.bf16.msra.mxu0 %v1278
        %1353 = vmatprep.subr.bf16.mxu0 %v1281
        %1354 = vmatpush1.bf16.msra.mxu0 %v1280
        %1355 = vmatprep.subr.bf16.mxu0 %v1283
        %1356 = vmatpush1.bf16.msra.mxu0 %v1282
        %1357 = vmatprep.subr.bf16.mxu0 %v1285
        %1358 = vmatpush1.bf16.msra.mxu0 %v1284
        %1359 = vmatprep.subr.bf16.mxu0 %v1287
        %1360 = vmatpush1.bf16.msra.mxu0 %v1286
        %1361 = vmatprep.subr.bf16.mxu0 %v1289
        %1362 = vmatpush1.bf16.msra.mxu0 %v1288
        %1363 = vmatprep.subr.bf16.mxu0 %v1291
        %1364 = vmatpush1.bf16.msra.mxu0 %v1290
        %1365 = vmatprep.subr.bf16.mxu0 %v1293
        %1366 = vmatpush1.bf16.msra.mxu0 %v1292
        %1367 = vmatprep.mubr.bf16.mxu0 %v1319
        %1368 = vmatmul.mubr.bf16.gmra.mrb[0].mxu0 %v1318
        %v1369 = vpop.f32.mrb[0].mxu0
        %v1370 = vadd.f32 0.0, %v1369
        %v1371 = vpop.f32.mrb[0].mxu0
        %v1372 = vadd.f32 0.0, %v1371
        %v1373 = vpop.f32.mrb[0].mxu0
        %v1374 = vadd.f32 0.0, %v1373
        %v1375 = vpop.f32.mrb[0].mxu0
        %v1376 = vadd.f32 0.0, %v1375
        %1377 = vmatprep.mubr.bf16.mxu0 %v1322
        %1378 = vmatmul.mubr.bf16.gmra.mrb[0].mxu0 %v1321
        %v1379 = vpop.f32.mrb[0].mxu0
        %v1380 = vadd.f32 0.0, %v1379
        %v1381 = vpop.f32.mrb[0].mxu0
        %v1382 = vadd.f32 0.0, %v1381
        %v1383 = vpop.f32.mrb[0].mxu0
        %v1384 = vadd.f32 0.0, %v1383
        %v1385 = vpop.f32.mrb[0].mxu0
        %v1386 = vadd.f32 0.0, %v1385
        %1387 = vdwg.mxu0
        %1388 = vmatprep.subr.bf16.mxu0 %v1295
        %1389 = vmatpush1.bf16.msra.mxu0 %v1294
        %1390 = vmatprep.subr.bf16.mxu0 %v1297
        %1391 = vmatpush1.bf16.msra.mxu0 %v1296
        %1392 = vmatprep.subr.bf16.mxu0 0
        %1393 = vmatpush1.bf16.msra.mxu0 0
        %1394 = vmatprep.subr.bf16.mxu0 0
        %1395 = vmatpush1.bf16.msra.mxu0 0
        %1396 = vmatprep.subr.bf16.mxu0 0
        %1397 = vmatpush1.bf16.msra.mxu0 0
        %1398 = vmatprep.subr.bf16.mxu0 0
        %1399 = vmatpush1.bf16.msra.mxu0 0
        %1400 = vmatprep.subr.bf16.mxu0 0
        %1401 = vmatpush1.bf16.msra.mxu0 0
        %1402 = vmatprep.subr.bf16.mxu0 0
        %1403 = vmatpush1.bf16.msra.mxu0 0
        %1404 = vmatprep.subr.bf16.mxu0 0
        %1405 = vmatpush1.bf16.msra.mxu0 0
        %1406 = vmatprep.subr.bf16.mxu0 0
        %1407 = vmatpush1.bf16.msra.mxu0 0
        %1408 = vmatprep.subr.bf16.mxu0 0
        %1409 = vmatpush1.bf16.msra.mxu0 0
        %1410 = vmatprep.subr.bf16.mxu0 0
        %1411 = vmatpush1.bf16.msra.mxu0 0
        %1412 = vmatprep.subr.bf16.mxu0 0
        %1413 = vmatpush1.bf16.msra.mxu0 0
        %1414 = vmatprep.subr.bf16.mxu0 0
        %1415 = vmatpush1.bf16.msra.mxu0 0
        %1416 = vmatprep.subr.bf16.mxu0 0
        %1417 = vmatpush1.bf16.msra.mxu0 0
        %1418 = vmatprep.subr.bf16.mxu0 0
        %1419 = vmatpush1.bf16.msra.mxu0 0
        %1420 = vmatprep.mubr.bf16.mxu0 0
        %1421 = vmatmul.mubr.bf16.gmra.mrb[0].mxu0 %v1330
        %v1422 = vpop.f32.mrb[0].mxu0
        %v1423 = vadd.f32 %v1370, %v1422
        %v1424 = vpop.f32.mrb[0].mxu0
        %v1425 = vadd.f32 %v1372, %v1424
        %v1426 = vpop.f32.mrb[0].mxu0
        %v1427 = vadd.f32 %v1374, %v1426
        %v1428 = vpop.f32.mrb[0].mxu0
        %v1429 = vadd.f32 %v1376, %v1428
        %1430 = vmatprep.mubr.bf16.mxu0 0
        %1431 = vmatmul.mubr.bf16.gmra.mrb[0].mxu0 %v1333
        %v1432 = vpop.f32.mrb[0].mxu0
        %v1433 = vadd.f32 %v1380, %v1432
        %v1434 = vpop.f32.mrb[0].mxu0
        %v1435 = vadd.f32 %v1382, %v1434
        %v1436 = vpop.f32.mrb[0].mxu0
        %v1437 = vadd.f32 %v1384, %v1436
        %v1438 = vpop.f32.mrb[0].mxu0
        %v1439 = vadd.f32 %v1386, %v1438
        %1440 = vdwg.mxu0
        %v1441 = vld [vmem:[%s5] sm:$0xf]
        %v1442 = vld [vmem:[%s5 + $0x4] sm:$0xf]
        %v1443 = vld [vmem:[%s5 + $0x8] sm:$0xf]
        %v1444 = vld [vmem:[%s5 + $0xc] sm:$0xf]
        %v1449 = vunpack.c.l.b16 %v1441
        %v1450 = vunpack.c.l.b16 %v1442
        %v1451 = vunpack.c.l.b16 %v1443
        %v1452 = vunpack.c.l.b16 %v1444
        %v1453 = vpack.c.b16 %v1450, %v1449
        %v1454 = vpack.c.b16 %v1452, %v1451
        %v1456 = vsel %vm773, %v1453, 0
        %v1459 = vsel %vm773, %v1454, 0
        %1461 = vmatprep.subr.bf16.mxu0 %v569
        %1462 = vmatpush1.bf16.msra.mxu0 %v568
        %1463 = vmatprep.subr.bf16.mxu0 0
        %1464 = vmatpush1.bf16.msra.mxu0 0
        %1465 = vmatprep.subr.bf16.mxu0 0
        %1466 = vmatpush1.bf16.msra.mxu0 0
        %1467 = vmatprep.subr.bf16.mxu0 0
        %1468 = vmatpush1.bf16.msra.mxu0 0
        %1469 = vmatprep.subr.bf16.mxu0 0
        %1470 = vmatpush1.bf16.msra.mxu0 0
        %1471 = vmatprep.subr.bf16.mxu0 0
        %1472 = vmatpush1.bf16.msra.mxu0 0
        %1473 = vmatprep.subr.bf16.mxu0 0
        %1474 = vmatpush1.bf16.msra.mxu0 0
        %1475 = vmatprep.subr.bf16.mxu0 0
        %1476 = vmatpush1.bf16.msra.mxu0 0
        %1477 = vmatprep.subr.bf16.mxu0 0
        %1478 = vmatpush1.bf16.msra.mxu0 0
        %1479 = vmatprep.subr.bf16.mxu0 0
        %1480 = vmatpush1.bf16.msra.mxu0 0
        %1481 = vmatprep.subr.bf16.mxu0 0
        %1482 = vmatpush1.bf16.msra.mxu0 0
        %1483 = vmatprep.subr.bf16.mxu0 0
        %1484 = vmatpush1.bf16.msra.mxu0 0
        %1485 = vmatprep.subr.bf16.mxu0 0
        %1486 = vmatpush1.bf16.msra.mxu0 0
        %1487 = vmatprep.subr.bf16.mxu0 0
        %1488 = vmatpush1.bf16.msra.mxu0 0
        %1489 = vmatprep.subr.bf16.mxu0 0
        %1490 = vmatpush1.bf16.msra.mxu0 0
        %1491 = vmatprep.subr.bf16.mxu0 0
        %1492 = vmatpush1.bf16.msra.mxu0 0
        %1493 = vmatprep.mubr.bf16.mxu0 0
        %1494 = vmatmul.mubr.bf16.gmra.mrb[0].mxu0 %v1456
        %v1495 = vpop.f32.mrb[0].mxu0
        %v1496 = vadd.f32 0.0, %v1495
        %v1497 = vpop.f32.mrb[0].mxu0
        %v1498 = vadd.f32 0.0, %v1497
        %v1499 = vpop.f32.mrb[0].mxu0
        %v1500 = vadd.f32 0.0, %v1499
        %v1501 = vpop.f32.mrb[0].mxu0
        %v1502 = vadd.f32 0.0, %v1501
        %1503 = vmatprep.mubr.bf16.mxu0 0
        %1504 = vmatmul.mubr.bf16.gmra.mrb[0].mxu0 %v1459
        %v1505 = vpop.f32.mrb[0].mxu0
        %v1506 = vadd.f32 0.0, %v1505
        %v1507 = vpop.f32.mrb[0].mxu0
        %v1508 = vadd.f32 0.0, %v1507
        %v1509 = vpop.f32.mrb[0].mxu0
        %v1510 = vadd.f32 0.0, %v1509
        %v1511 = vpop.f32.mrb[0].mxu0
        %v1512 = vadd.f32 0.0, %v1511
        %1513 = vdwg.mxu0
        %v1514 = vld [vmem:[%s6] sm:$0xf]
        %v1515 = vld [vmem:[%s6 + $0x4] sm:$0xf]
        %v1516 = vld [vmem:[%s6 + $0x8] sm:$0xf]
        %v1517 = vld [vmem:[%s6 + $0xc] sm:$0xf]
        %v1518 = vld [vmem:[%s6 + $0x10] sm:$0xf]
        %v1519 = vld [vmem:[%s6 + $0x14] sm:$0xf]
        %v1520 = vld [vmem:[%s6 + $0x18] sm:$0xf]
        %v1521 = vld [vmem:[%s6 + $0x1c] sm:$0xf]
        %v1522 = vld [vmem:[%s6 + $0x20] sm:$0xf]
        %v1523 = vld [vmem:[%s6 + $0x24] sm:$0xf]
        %v1524 = vld [vmem:[%s6 + $0x28] sm:$0xf]
        %v1525 = vld [vmem:[%s6 + $0x2c] sm:$0xf]
        %v1526 = vld [vmem:[%s6 + $0x30] sm:$0xf]
        %v1527 = vld [vmem:[%s6 + $0x34] sm:$0xf]
        %v1528 = vld [vmem:[%s6 + $0x38] sm:$0xf]
        %v1529 = vld [vmem:[%s6 + $0x3c] sm:$0xf]
        %v1530 = vld [vmem:[%s6 + $0x40] sm:$0xf]
        %v1531 = vld [vmem:[%s6 + $0x44] sm:$0xf]
        %v1532 = vld [vmem:[%s6 + $0x48] sm:$0xf]
        %v1533 = vld [vmem:[%s6 + $0x4c] sm:$0xf]
        %v1534 = vld [vmem:[%s6 + $0x50] sm:$0xf]
        %v1535 = vld [vmem:[%s6 + $0x54] sm:$0xf]
        %v1536 = vld [vmem:[%s6 + $0x58] sm:$0xf]
        %v1537 = vld [vmem:[%s6 + $0x5c] sm:$0xf]
        %v1538 = vld [vmem:[%s6 + $0x60] sm:$0xf]
        %v1539 = vld [vmem:[%s6 + $0x64] sm:$0xf]
        %v1540 = vld [vmem:[%s6 + $0x68] sm:$0xf]
        %v1541 = vld [vmem:[%s6 + $0x6c] sm:$0xf]
        %v1542 = vld [vmem:[%s6 + $0x70] sm:$0xf]
        %v1543 = vld [vmem:[%s6 + $0x74] sm:$0xf]
        %v1544 = vld [vmem:[%s6 + $0x78] sm:$0xf]
        %v1545 = vld [vmem:[%s6 + $0x7c] sm:$0xf]
        %1546 = vset.pattern.permute.xlu0 2
        %1547 = vperm.xlu0 %1546, %v391
        %v1548 = vpop.permute.xlu0 %1547
        %1550 = vset.pattern.permute.xlu0 2
        %1551 = vperm.xlu0 %1550, %v392
        %v1552 = vpop.permute.xlu0 %1551
        %1554 = vset.pattern.permute.xlu0 2
        %1555 = vperm.xlu0 %1554, %v393
        %v1556 = vpop.permute.xlu0 %1555
        %1558 = vset.pattern.permute.xlu0 2
        %1559 = vperm.xlu0 %1558, %v394
        %v1560 = vpop.permute.xlu0 %1559
        %v1562 = vmul.f32 %v1423, %v1548
        %v1563 = vmul.f32 %v1425, %v1548
        %v1564 = vmul.f32 %v1427, %v1552
        %v1565 = vmul.f32 %v1429, %v1552
        %v1566 = vmul.f32 %v1433, %v1556
        %v1567 = vmul.f32 %v1435, %v1556
        %v1568 = vmul.f32 %v1437, %v1560
        %v1569 = vmul.f32 %v1439, %v1560
        %1570 = vset.pattern.permute.xlu0 3
        %1571 = vperm.xlu0 %1570, %v391
        %v1572 = vpop.permute.xlu0 %1571
        %1574 = vset.pattern.permute.xlu0 3
        %1575 = vperm.xlu0 %1574, %v392
        %v1576 = vpop.permute.xlu0 %1575
        %1578 = vset.pattern.permute.xlu0 3
        %1579 = vperm.xlu0 %1578, %v393
        %v1580 = vpop.permute.xlu0 %1579
        %1582 = vset.pattern.permute.xlu0 3
        %1583 = vperm.xlu0 %1582, %v394
        %v1584 = vpop.permute.xlu0 %1583
        %v1586 = vadd.f32 %v1562, %v1572
        %v1587 = vadd.f32 %v1563, %v1572
        %v1588 = vadd.f32 %v1564, %v1576
        %v1589 = vadd.f32 %v1565, %v1576
        %v1590 = vadd.f32 %v1566, %v1580
        %v1591 = vadd.f32 %v1567, %v1580
        %v1592 = vadd.f32 %v1568, %v1584
        %v1593 = vadd.f32 %v1569, %v1584
        %v1594 = vadd.f32 %v1586, %v1496
        %v1595 = vadd.f32 %v1587, %v1498
        %v1596 = vadd.f32 %v1588, %v1500
        %v1597 = vadd.f32 %v1589, %v1502
        %v1598 = vadd.f32 %v1590, %v1506
        %v1599 = vadd.f32 %v1591, %v1508
        %v1600 = vadd.f32 %v1592, %v1510
        %v1601 = vadd.f32 %v1593, %v1512
        %vm1602 = vcmp.ge.f32.partialorder %v1594, 0.0
        %vm1603 = vcmp.ge.f32.partialorder %v1595, 0.0
        %vm1604 = vcmp.ge.f32.partialorder %v1596, 0.0
        %vm1605 = vcmp.ge.f32.partialorder %v1597, 0.0
        %vm1606 = vcmp.ge.f32.partialorder %v1598, 0.0
        %vm1607 = vcmp.ge.f32.partialorder %v1599, 0.0
        %vm1608 = vcmp.ge.f32.partialorder %v1600, 0.0
        %vm1609 = vcmp.ge.f32.partialorder %v1601, 0.0
        %v1610 = vstv %s389
        %v1611 = vmul.f32 %v1610, %v1594
        %v1612 = vmul.f32 %v1610, %v1595
        %v1613 = vmul.f32 %v1610, %v1596
        %v1614 = vmul.f32 %v1610, %v1597
        %v1615 = vmul.f32 %v1610, %v1598
        %v1616 = vmul.f32 %v1610, %v1599
        %v1617 = vmul.f32 %v1610, %v1600
        %v1618 = vmul.f32 %v1610, %v1601
        %v1619 = vsel %vm1602, %v1594, %v1611
        %v1620 = vsel %vm1603, %v1595, %v1612
        %v1621 = vsel %vm1604, %v1596, %v1613
        %v1622 = vsel %vm1605, %v1597, %v1614
        %v1623 = vsel %vm1606, %v1598, %v1615
        %v1624 = vsel %vm1607, %v1599, %v1616
        %v1625 = vsel %vm1608, %v1600, %v1617
        %v1626 = vsel %vm1609, %v1601, %v1618
        %v1627 = vpack.c.bf16 %v1621, %v1619
        %v1628 = vpack.c.bf16 %v1622, %v1620
        %v1629 = vpack.c.bf16 %v1625, %v1623
        %v1630 = vpack.c.bf16 %v1626, %v1624
        %v1663 = vunpack.c.l.b16 %v1514
        %v1664 = vunpack.c.l.b16 %v1515
        %v1665 = vunpack.c.l.b16 %v1516
        %v1666 = vunpack.c.l.b16 %v1517
        %v1667 = vunpack.c.l.b16 %v1518
        %v1668 = vunpack.c.l.b16 %v1519
        %v1669 = vunpack.c.l.b16 %v1520
        %v1670 = vunpack.c.l.b16 %v1521
        %v1671 = vunpack.c.l.b16 %v1522
        %v1672 = vunpack.c.l.b16 %v1523
        %v1673 = vunpack.c.l.b16 %v1524
        %v1674 = vunpack.c.l.b16 %v1525
        %v1675 = vunpack.c.l.b16 %v1526
        %v1676 = vunpack.c.l.b16 %v1527
        %v1677 = vunpack.c.l.b16 %v1528
        %v1678 = vunpack.c.l.b16 %v1529
        %v1679 = vunpack.c.l.b16 %v1530
        %v1680 = vunpack.c.l.b16 %v1531
        %v1681 = vunpack.c.l.b16 %v1532
        %v1682 = vunpack.c.l.b16 %v1533
        %v1683 = vunpack.c.l.b16 %v1534
        %v1684 = vunpack.c.l.b16 %v1535
        %v1685 = vunpack.c.l.b16 %v1536
        %v1686 = vunpack.c.l.b16 %v1537
        %v1687 = vunpack.c.l.b16 %v1538
        %v1688 = vunpack.c.l.b16 %v1539
        %v1689 = vunpack.c.l.b16 %v1540
        %v1690 = vunpack.c.l.b16 %v1541
        %v1691 = vunpack.c.l.b16 %v1542
        %v1692 = vunpack.c.l.b16 %v1543
        %v1693 = vunpack.c.l.b16 %v1544
        %v1694 = vunpack.c.l.b16 %v1545
        %v1695 = vpack.c.b16 %v1664, %v1663
        %v1696 = vpack.c.b16 %v1666, %v1665
        %v1697 = vpack.c.b16 %v1668, %v1667
        %v1698 = vpack.c.b16 %v1670, %v1669
        %v1699 = vpack.c.b16 %v1672, %v1671
        %v1700 = vpack.c.b16 %v1674, %v1673
        %v1701 = vpack.c.b16 %v1676, %v1675
        %v1702 = vpack.c.b16 %v1678, %v1677
        %v1703 = vpack.c.b16 %v1680, %v1679
        %v1704 = vpack.c.b16 %v1682, %v1681
        %v1705 = vpack.c.b16 %v1684, %v1683
        %v1706 = vpack.c.b16 %v1686, %v1685
        %v1707 = vpack.c.b16 %v1688, %v1687
        %v1708 = vpack.c.b16 %v1690, %v1689
        %v1709 = vpack.c.b16 %v1692, %v1691
        %v1710 = vpack.c.b16 %v1694, %v1693
        %1727 = vmatprep.subr.bf16.mxu0 0
        %1728 = vmatpush1.bf16.msra.mxu0 %v1695
        %1729 = vmatprep.subr.bf16.mxu0 0
        %1730 = vmatpush1.bf16.msra.mxu0 %v1696
        %1731 = vmatprep.subr.bf16.mxu0 0
        %1732 = vmatpush1.bf16.msra.mxu0 %v1697
        %1733 = vmatprep.subr.bf16.mxu0 0
        %1734 = vmatpush1.bf16.msra.mxu0 %v1698
        %1735 = vmatprep.subr.bf16.mxu0 0
        %1736 = vmatpush1.bf16.msra.mxu0 %v1699
        %1737 = vmatprep.subr.bf16.mxu0 0
        %1738 = vmatpush1.bf16.msra.mxu0 %v1700
        %1739 = vmatprep.subr.bf16.mxu0 0
        %1740 = vmatpush1.bf16.msra.mxu0 %v1701
        %1741 = vmatprep.subr.bf16.mxu0 0
        %1742 = vmatpush1.bf16.msra.mxu0 %v1702
        %1743 = vmatprep.subr.bf16.mxu0 0
        %1744 = vmatpush1.bf16.msra.mxu0 %v1703
        %1745 = vmatprep.subr.bf16.mxu0 0
        %1746 = vmatpush1.bf16.msra.mxu0 %v1704
        %1747 = vmatprep.subr.bf16.mxu0 0
        %1748 = vmatpush1.bf16.msra.mxu0 %v1705
        %1749 = vmatprep.subr.bf16.mxu0 0
        %1750 = vmatpush1.bf16.msra.mxu0 %v1706
        %1751 = vmatprep.subr.bf16.mxu0 0
        %1752 = vmatpush1.bf16.msra.mxu0 %v1707
        %1753 = vmatprep.subr.bf16.mxu0 0
        %1754 = vmatpush1.bf16.msra.mxu0 %v1708
        %1755 = vmatprep.subr.bf16.mxu0 0
        %1756 = vmatpush1.bf16.msra.mxu0 %v1709
        %1757 = vmatprep.subr.bf16.mxu0 0
        %1758 = vmatpush1.bf16.msra.mxu0 %v1710
        %1759 = vmatprep.mubr.bf16.mxu0 %v1628
        %1760 = vmatmul.mubr.bf16.gmra.mrb[0].mxu0 %v1627
        %v1761 = vpop.f32.mrb[0].mxu0
        %v1762 = vadd.f32 0.0, %v1761
        %v1763 = vpop.f32.mrb[0].mxu0
        %v1764 = vpop.f32.mrb[0].mxu0
        %v1765 = vadd.f32 0.0, %v1764
        %v1766 = vpop.f32.mrb[0].mxu0
        %1767 = vmatprep.mubr.bf16.mxu0 %v1630
        %1768 = vmatmul.mubr.bf16.gmra.mrb[0].mxu0 %v1629
        %v1769 = vpop.f32.mrb[0].mxu0
        %v1770 = vadd.f32 0.0, %v1769
        %v1771 = vpop.f32.mrb[0].mxu0
        %v1772 = vpop.f32.mrb[0].mxu0
        %v1773 = vadd.f32 0.0, %v1772
        %v1774 = vpop.f32.mrb[0].mxu0
        %1775 = vdwg.mxu0
        %vm1776 = vcmask 523264
        %1777 = vst.msk [vmem:[%s374] sm:$0xff] %vm1776, %v1762
        %1778 = vst.msk [vmem:[%s374 + $0x8] sm:$0xff] %vm1776, %v1765
        %1779 = vst.msk [vmem:[%s374 + $0x10] sm:$0xff] %vm1776, %v1770
        %1780 = vst.msk [vmem:[%s374 + $0x18] sm:$0xff] %vm1776, %v1773
        %s1781 = sand.u32 %s214, 1
        %s1782 = scalar_lea.sflag [#allocation7], %s1781
        %s1783 = sand.u32 %s214, 1
        %s1784 = smul.addr %s1783, 32
        %s1785 = scalar_lea.vmem [#allocation9], %s1784
        // Predicated region
        $region80: #{tpu_custom_call.1} parent=70 // pred_check
          %p1786 = pneg %p224
        $region81: #{tpu_custom_call.1} parent=70 // pred_check_branch
          %1788 = sbr.rel (%p1786) target = $region83
        $region82: #{tpu_custom_call.1} parent=70 // pred_region
          %s1790 = ssub.s32 512, 512
          %1791 = vsyncadd %s1782, %s1790
          %s1792 = smul.addr %s23, 4
          %s1793 = smul.addr %s1792, 128
          %s1794 = scalar_lea.hbm %s8, %s1793
          %s1795 = sshll.u32 %s1785, 4
          %s1796 = int_to_ptr.vmem [resolvable:$true] %s1795
          %1801 = dma.vmem_to_hbm [thread:$0]  %s1796, 512, %s1794, %s1782, 128, 128, 8
        $region83: #{tpu_custom_call.1} parent=70 // pred_fallthru
          _
      $region71: #{tpu_custom_call.1} parent=5 // pred_fallthru
        _
      %p1802 = scmp.le.s32.totalorder 2, %s18
      // Predicated region
      $region84: #{tpu_custom_call.1} parent=5 // pred_check
        %p1803 = pneg %p1802
      $region85: #{tpu_custom_call.1} parent=5 // pred_check_branch
        %1805 = sbr.rel (%p1803) target = $region87
      $region86: #{tpu_custom_call.1} parent=5 // pred_region
        %s1806 = ssub.s32 %s18, 2
        // Predicated region
        $region88: #{tpu_custom_call.1} parent=86 // pred_check
          %p1807 = pneg %p230
        $region89: #{tpu_custom_call.1} parent=86 // pred_check_branch
          %1809 = sbr.rel (%p1807) target = $region91
        $region90: #{tpu_custom_call.1} parent=86 // pred_region
          %s1810 = sand.u32 %s215, 1
          %s1811 = scalar_lea.sflag [#allocation7], %s1810
          %s1812 = sand.u32 %s215, 1
          %s1813 = smul.addr %s1812, 32
          %s1814 = scalar_lea.vmem [#allocation9], %s1813
          %1815 = dma.done %s1811, 512
        $region91: #{tpu_custom_call.1} parent=86 // pred_fallthru
          _
      $region87: #{tpu_custom_call.1} parent=5 // pred_fallthru
        _
    $region6: #{tpu_custom_call.1} parent=1 // loop_footer
      %s22 = sadd.s32 1, %s18
    $region7: #{tpu_custom_call.1} parent=1 // loop_footer_branch
      %17 = sbr.rel target = $region3
    $region8: #{tpu_custom_call.1} parent=1 // loop_exit
      _
    %1816 = vsyncpa [#allocation7], 1
    %s1817 = scalar_lea.sflag [#allocation7], 1
    %1818 = vsyncpa %s1817, 1
    %1819 = vsyncpa [#allocation8], 1
    %s1820 = scalar_lea.sflag [#allocation8], 1
    %1821 = vsyncpa %s1820, 1

</llo_original>
